<compile_context>
chip_gen: v5e
topology: v5e:2x2
jax: 0.10.0
libtpu: 0.0.40
codegen_flags: <defaults>
</compile_context>

<pallas_src>
import functools

import jax
import jax.numpy as jnp
from jax.experimental import pallas as pl
from jax.experimental.pallas import tpu as pltpu

EPS = 1e-5
DEFAULT_TILE_M = 512
_VMEM_LIMIT = 32 * 1024 * 1024  # conservative: safe on v5e/v6e/v7x


def _round_up(x, m):
    return ((x + m - 1) // m) * m


def _compiler_params():
    return pltpu.CompilerParams(
        dimension_semantics=("parallel",),
        vmem_limit_bytes=_VMEM_LIMIT,
    )


def _pad_cols(x, m_pad):
    m = x.shape[1]
    if m_pad != m:
        x = jnp.pad(x, ((0, 0), (0, m_pad - m)))
    return x


# ----------------------------------------------------------------------------
# Kernels.
# ----------------------------------------------------------------------------
def _matmul_stats_kernel(x_ref, w_ref, y_ref, sum_ref, sq_ref):
    # y = W @ x ; W: (Cout, K) bf16, x: (K, TILE_M) bf16, f32 accumulation.
    y = jnp.dot(w_ref[...], x_ref[...], preferred_element_type=jnp.float32)
    y_ref[...] = y
    # Per-tile per-channel partial (sum, sumsq) over the lane (M) axis.
    sum_ref[...] = jnp.sum(y, axis=1, keepdims=True)[None]
    sq_ref[...] = jnp.sum(y * y, axis=1, keepdims=True)[None]


def _bnrelu_matmul_stats_kernel(x_ref, scale_ref, shift_ref, w_ref,
                                y_ref, sum_ref, sq_ref,
                                *, tile_m, m_real, need_mask):
    # Normalize + ReLU the previous stage (f32 FMA, BN folded into scale/shift),
    # then bf16 matmul (f32 acc) + stats for the current stage.
    a = jnp.maximum(x_ref[...] * scale_ref[...] + shift_ref[...], 0.0)
    if need_mask:
        # Zero out tile-padding columns so the matmul output (and hence the BN
        # statistics) only sees the real M columns.
        col = (pl.program_id(0) * tile_m
               + jax.lax.broadcasted_iota(jnp.int32, (1, tile_m), 1))
        a = jnp.where(col < m_real, a, 0.0)
    y = jnp.dot(w_ref[...], a.astype(jnp.bfloat16),
                preferred_element_type=jnp.float32)
    y_ref[...] = y
    sum_ref[...] = jnp.sum(y, axis=1, keepdims=True)[None]
    sq_ref[...] = jnp.sum(y * y, axis=1, keepdims=True)[None]


def _bnrelu_kernel(x_ref, scale_ref, shift_ref, o_ref):
    o_ref[...] = jnp.maximum(
        x_ref[...] * scale_ref[...] + shift_ref[...], 0.0).astype(o_ref.dtype)


# ----------------------------------------------------------------------------
# pallas_call wrappers (all tiled over M on the lane axis).
# ----------------------------------------------------------------------------
def matmul_stats(x, w, *, tile_m=DEFAULT_TILE_M):
    """y = w @ x with per-channel (sum, sumsq) over columns. x:(K,M), w:(Cout,K)."""
    k, m = x.shape
    cout = w.shape[0]
    tm = min(tile_m, _round_up(m, 128))
    m_pad = _round_up(m, tm)
    grid = (m_pad // tm,)
    # Zero-padded columns contribute exactly zero to y and to the stats.
    x_p = _pad_cols(x.astype(jnp.bfloat16), m_pad)
    y, s, ss = pl.pallas_call(
        _matmul_stats_kernel,
        out_shape=(jax.ShapeDtypeStruct((cout, m_pad), jnp.float32),
                   jax.ShapeDtypeStruct((grid[0], cout, 1), jnp.float32),
                   jax.ShapeDtypeStruct((grid[0], cout, 1), jnp.float32)),
        grid=grid,
        in_specs=[pl.BlockSpec((k, tm), lambda i: (0, i)),
                  pl.BlockSpec((cout, k), lambda i: (0, 0))],
        out_specs=(pl.BlockSpec((cout, tm), lambda i: (0, i)),
                   pl.BlockSpec((1, cout, 1), lambda i: (i, 0, 0)),
                   pl.BlockSpec((1, cout, 1), lambda i: (i, 0, 0))),
        compiler_params=_compiler_params(),
    )(x_p, w.astype(jnp.bfloat16))
    return y[:, :m], jnp.sum(s, axis=0)[:, 0], jnp.sum(ss, axis=0)[:, 0]


def bnrelu_matmul_stats(x, scale, shift, w, *, tile_m=DEFAULT_TILE_M):
    """y = w @ relu(x*scale+shift) with stats. x:(K,M) raw, scale/shift:(K,1)."""
    k, m = x.shape
    cout = w.shape[0]
    tm = min(tile_m, _round_up(m, 128))
    m_pad = _round_up(m, tm)
    grid = (m_pad // tm,)
    x_p = _pad_cols(x.astype(jnp.float32), m_pad)
    kernel = functools.partial(_bnrelu_matmul_stats_kernel,
                               tile_m=tm, m_real=m, need_mask=(m_pad != m))
    y, s, ss = pl.pallas_call(
        kernel,
        out_shape=(jax.ShapeDtypeStruct((cout, m_pad), jnp.float32),
                   jax.ShapeDtypeStruct((grid[0], cout, 1), jnp.float32),
                   jax.ShapeDtypeStruct((grid[0], cout, 1), jnp.float32)),
        grid=grid,
        in_specs=[pl.BlockSpec((k, tm), lambda i: (0, i)),
                  pl.BlockSpec((k, 1), lambda i: (0, 0)),
                  pl.BlockSpec((k, 1), lambda i: (0, 0)),
                  pl.BlockSpec((cout, k), lambda i: (0, 0))],
        out_specs=(pl.BlockSpec((cout, tm), lambda i: (0, i)),
                   pl.BlockSpec((1, cout, 1), lambda i: (i, 0, 0)),
                   pl.BlockSpec((1, cout, 1), lambda i: (i, 0, 0))),
        compiler_params=_compiler_params(),
    )(x_p, scale, shift, w.astype(jnp.bfloat16))
    return y[:, :m], jnp.sum(s, axis=0)[:, 0], jnp.sum(ss, axis=0)[:, 0]


def bn_relu(x, scale, shift, *, tile_m=DEFAULT_TILE_M, out_dtype=jnp.float32):
    """relu(x*scale+shift), tiled elementwise. x:(C,M), scale/shift:(C,1)."""
    c, m = x.shape
    tm = min(tile_m, _round_up(m, 128))
    m_pad = _round_up(m, tm)
    x_p = _pad_cols(x, m_pad)
    out = pl.pallas_call(
        _bnrelu_kernel,
        out_shape=jax.ShapeDtypeStruct((c, m_pad), out_dtype),
        grid=(m_pad // tm,),
        in_specs=[pl.BlockSpec((c, tm), lambda i: (0, i)),
                  pl.BlockSpec((c, 1), lambda i: (0, 0)),
                  pl.BlockSpec((c, 1), lambda i: (0, 0))],
        out_specs=pl.BlockSpec((c, tm), lambda i: (0, i)),
        compiler_params=_compiler_params(),
    )(x_p, scale, shift)
    return out[:, :m]


# ----------------------------------------------------------------------------
# BN fold: (sum, sumsq) -> per-channel scale/shift (tiny, wrapper-side).
# ----------------------------------------------------------------------------
def _bn_fold(s, ss, count, gamma, beta):
    mean = s / count
    var = jnp.maximum(ss / count - mean * mean, 0.0)   # biased batch variance
    scale = gamma * jax.lax.rsqrt(var + EPS)
    shift = beta - mean * scale
    return (scale.reshape(-1, 1).astype(jnp.float32),
            shift.reshape(-1, 1).astype(jnp.float32))


# ----------------------------------------------------------------------------
# Subpixel weight for ConvTranspose3d(k=3, s=2, p=1, output_padding=1).
# ----------------------------------------------------------------------------
def _build_deconv_subpixel_weight(wt):
    """wt: ConvTranspose3d weight (Cin, Cout, 3, 3, 3), Cin == Cout == cmid.
    Returns W_big (8*cmid, 8*cmid): rows = (pd, ph, pw, cout),
    cols = (dd, dh, dw, cin), so that
      out[n, 2d+pd, 2h+ph, 2w+pw, cout]
        = sum_{dd,dh,dw,cin} W_big[row, col] * a1[n, d+dd, h+dh, w+dw, cin]
    with a1 zero-padded by one voxel on the high side of each spatial axis.
    Per axis: kd = pd - 2*dd + 1 must lie in {0,1,2}."""
    cmid = wt.shape[0]
    w_big = jnp.zeros((2, 2, 2, cmid, 2, 2, 2, cmid), jnp.float32)
    for pd in range(2):
        for dd in range(2):
            kd = pd - 2 * dd + 1
            if kd < 0 or kd > 2:
                continue
            for ph in range(2):
                for dh in range(2):
                    kh = ph - 2 * dh + 1
                    if kh < 0 or kh > 2:
                        continue
                    for pw in range(2):
                        for dw in range(2):
                            kw = pw - 2 * dw + 1
                            if kw < 0 or kw > 2:
                                continue
                            w_big = w_big.at[pd, ph, pw, :, dd, dh, dw, :].set(
                                wt[:, :, kd, kh, kw].T)   # (cout, cin)
    return w_big.reshape(8 * cmid, 8 * cmid)


# ----------------------------------------------------------------------------
# Parameter init (shapes follow the nn.Module __init__; deterministic).
# ----------------------------------------------------------------------------
def init_params(key, in_channels, n_filters):
    cmid = in_channels // 4
    ks = jax.random.split(key, 12)
    # conv1: torch weight (cmid, Cin, 1, 1, 1) -> (cmid, Cin)
    w1 = jax.random.normal(ks[0], (cmid, in_channels), jnp.float32) * 0.1
    b1 = jax.random.normal(ks[1], (cmid,), jnp.float32) * 0.1
    # deconv2: torch ConvTranspose3d weight (Cin=cmid, Cout=cmid, 3, 3, 3)
    wt2 = jax.random.normal(ks[2], (cmid, cmid, 3, 3, 3), jnp.float32) * 0.1
    b2 = jax.random.normal(ks[3], (cmid,), jnp.float32) * 0.1
    # conv3: torch weight (n_filters, cmid, 1, 1, 1) -> (nf, cmid)
    w3 = jax.random.normal(ks[4], (n_filters, cmid), jnp.float32) * 0.1
    b3 = jax.random.normal(ks[5], (n_filters,), jnp.float32) * 0.1
    g1 = 1.0 + 0.1 * jax.random.normal(ks[6], (cmid,), jnp.float32)
    be1 = 0.1 * jax.random.normal(ks[7], (cmid,), jnp.float32)
    g2 = 1.0 + 0.1 * jax.random.normal(ks[8], (cmid,), jnp.float32)
    be2 = 0.1 * jax.random.normal(ks[9], (cmid,), jnp.float32)
    g3 = 1.0 + 0.1 * jax.random.normal(ks[10], (n_filters,), jnp.float32)
    be3 = 0.1 * jax.random.normal(ks[11], (n_filters,), jnp.float32)
    return dict(w1=w1, b1=b1, g1=g1, be1=be1,
                wt2=wt2, w2_big=_build_deconv_subpixel_weight(wt2),
                b2=b2, g2=g2, be2=be2,
                w3=w3, b3=b3, g3=g3, be3=be3)


# ----------------------------------------------------------------------------
# Full DecoderBlock forward (NCDHW in / NCDHW out).
# ----------------------------------------------------------------------------
def decoder_block_forward(x, params, *, tile_m=DEFAULT_TILE_M):
    N, Cin, D, H, W = x.shape
    cmid = Cin // 4
    nf = params["w3"].shape[0]
    M = N * D * H * W
    Mo = 8 * M

    # -- stage 1: 1x1x1 conv (channel matmul) + BN1 partial stats --------------
    xc = jnp.transpose(x, (1, 0, 2, 3, 4)).reshape(Cin, M)     # channels-first
    y1_raw, s1, ss1 = matmul_stats(xc, params["w1"], tile_m=tile_m)   # (cmid, M)
    scale1, shift1 = _bn_fold(s1, ss1, M, params["g1"], params["be1"])
    # BN1 + ReLU (boundary taps of the deconv must see true zeros, so normalize
    # before gathering the subpixel neighborhood).  Output bf16: it only feeds
    # the stage-2 matmul, and this halves the im2col HBM traffic.
    a1 = bn_relu(y1_raw, scale1, shift1, tile_m=tile_m, out_dtype=jnp.bfloat16)

    # -- stage 2: ConvTranspose3d(3, s=2, p=1, op=1) via subpixel decomposition -
    a1_s = a1.reshape(cmid, N, D, H, W)
    a1_p = jnp.pad(a1_s, ((0, 0), (0, 0), (0, 1), (0, 1), (0, 1)))
    views = [a1_p[:, :, dd:dd + D, dh:dh + H, dw:dw + W]
             for dd in range(2) for dh in range(2) for dw in range(2)]
    patches = jnp.concatenate(views, axis=0).reshape(8 * cmid, M)   # (tap,cin) rows
    y2_raw, s2, ss2 = matmul_stats(patches, params["w2_big"], tile_m=tile_m)
    s2 = jnp.sum(s2.reshape(8, cmid), axis=0)      # fold the 8 parity groups
    ss2 = jnp.sum(ss2.reshape(8, cmid), axis=0)
    scale2, shift2 = _bn_fold(s2, ss2, Mo, params["g2"], params["be2"])

    # interleave parities into the 2x-upsampled grid (wrapper glue / XLA).
    y2_s = y2_raw.reshape(2, 2, 2, cmid, N, D, H, W)
    y2_s = jnp.transpose(y2_s, (3, 4, 5, 0, 6, 1, 7, 2))   # (c,N,D,pd,H,ph,W,pw)
    y2_flat = y2_s.reshape(cmid, Mo)

    # -- stage 3: BN2 + ReLU fused with the 1x1x1 conv + BN3 partial stats ------
    y3_raw, s3, ss3 = bnrelu_matmul_stats(y2_flat, scale2, shift2,
                                          params["w3"], tile_m=tile_m)  # (nf, Mo)
    scale3, shift3 = _bn_fold(s3, ss3, Mo, params["g3"], params["be3"])

    # -- final BN3 + ReLU --------------------------------------------------------
    out = bn_relu(y3_raw, scale3, shift3, tile_m=tile_m)                # (nf, Mo)
    out = out.reshape(nf, N, 2 * D, 2 * H, 2 * W)
    return jnp.transpose(out, (1, 0, 2, 3, 4))             # back to NCDHW


# ----------------------------------------------------------------------------
# Pure-JAX f32 reference (keeps the conv biases; BN cancels them exactly).
# ----------------------------------------------------------------------------
def decoder_block_reference(x, params):
    def bn_relu_ref(y, gamma, beta):
        mean = jnp.mean(y, axis=(0, 2, 3, 4), keepdims=True)
        var = jnp.mean(jnp.square(y - mean), axis=(0, 2, 3, 4), keepdims=True)
        yhat = (y - mean) * jax.lax.rsqrt(var + EPS)
        return jnp.maximum(yhat * gamma.reshape(1, -1, 1, 1, 1)
                           + beta.reshape(1, -1, 1, 1, 1), 0.0)

    hi = jax.lax.Precision.HIGHEST
    y = jnp.einsum("ncdhw,kc->nkdhw", x, params["w1"], precision=hi) \
        + params["b1"].reshape(1, -1, 1, 1, 1)
    y = bn_relu_ref(y, params["g1"], params["be1"])
    wt = params["wt2"]                                      # (Cin, Cout, 3,3,3)
    w_conv = jnp.flip(wt, (2, 3, 4)).transpose(1, 0, 2, 3, 4)
    y = jax.lax.conv_general_dilated(
        y, w_conv, window_strides=(1, 1, 1),
        padding=[(1, 2), (1, 2), (1, 2)], lhs_dilation=(2, 2, 2),
        dimension_numbers=("NCDHW", "OIDHW", "NCDHW"), precision=hi)
    y = y + params["b2"].reshape(1, -1, 1, 1, 1)
    y = bn_relu_ref(y, params["g2"], params["be2"])
    y = jnp.einsum("ncdhw,kc->nkdhw", y, params["w3"], precision=hi) \
        + params["b3"].reshape(1, -1, 1, 1, 1)
    return bn_relu_ref(y, params["g3"], params["be3"])


if __name__ == "__main__":
    key = jax.random.PRNGKey(0)
    kx, kp = jax.random.split(key)

    N, Cin, D, H, W = 2, 16, 4, 4, 4
    n_filters = 8

    x = jax.random.normal(kx, (N, Cin, D, H, W), dtype=jnp.float32)
    params = init_params(kp, Cin, n_filters)

    fwd = jax.jit(decoder_block_forward)
    out = jax.block_until_ready(fwd(x, params))

    assert out.shape == (N, n_filters, 2 * D, 2 * H, 2 * W), out.shape
    assert bool(jnp.all(jnp.isfinite(out)))

    ref = decoder_block_reference(x, params)
    max_err = float(jnp.max(jnp.abs(out - ref)))
    assert max_err < 0.25, f"max abs error vs f32 reference: {max_err}"

    print("KERNEL_OK")
</pallas_src>

<mosaic_0001>
module attributes {stable_mosaic.version = 11 : i64} {
  func.func @_bnrelu_kernel(%arg0: i32, %arg1: memref<4x128xf32, #tpu.memory_space<vmem>>, %arg2: memref<4x1xf32, #tpu.memory_space<vmem>>, %arg3: memref<4x1xf32, #tpu.memory_space<vmem>>, %arg4: memref<4x128xbf16, #tpu.memory_space<vmem>>) attributes {dimension_semantics = [#tpu.dimension_semantics<parallel>], iteration_bounds = array<i64: 1>, scalar_prefetch = 0 : i64, scratch_operands = 0 : i64, tpu.core_type = #tpu.core_type<tc>, window_params = [{transform_indices = @transform_0, window_bounds = array<i64: 4, 128>}, {pipeline_mode = #tpu.pipeline_mode<synchronous>, transform_indices = @transform_1, window_bounds = array<i64: 4, 1>}, {pipeline_mode = #tpu.pipeline_mode<synchronous>, transform_indices = @transform_2, window_bounds = array<i64: 4, 1>}, {transform_indices = @transform_3, window_bounds = array<i64: 4, 128>}]} {
    %c0 = arith.constant 0 : index
    %c0_0 = arith.constant 0 : index
    %0 = vector.load %arg1[%c0, %c0_0] : memref<4x128xf32, #tpu.memory_space<vmem>>, vector<4x128xf32>
    %c0_1 = arith.constant 0 : index
    %c0_2 = arith.constant 0 : index
    %1 = vector.load %arg2[%c0_1, %c0_2] : memref<4x1xf32, #tpu.memory_space<vmem>>, vector<4x1xf32>
    %2 = vector.broadcast %1 : vector<4x1xf32> to vector<4x128xf32>
    %3 = arith.mulf %0, %2 : vector<4x128xf32>
    %c0_3 = arith.constant 0 : index
    %c0_4 = arith.constant 0 : index
    %4 = vector.load %arg3[%c0_3, %c0_4] : memref<4x1xf32, #tpu.memory_space<vmem>>, vector<4x1xf32>
    %5 = vector.broadcast %4 : vector<4x1xf32> to vector<4x128xf32>
    %6 = arith.addf %3, %5 : vector<4x128xf32>
    %cst = arith.constant 0.000000e+00 : f32
    %7 = vector.broadcast %cst : f32 to vector<4x128xf32>
    %8 = arith.maximumf %6, %7 : vector<4x128xf32>
    %9 = arith.truncf %8 : vector<4x128xf32> to vector<4x128xbf16>
    %c0_5 = arith.constant 0 : index
    %c0_6 = arith.constant 0 : index
    %10 = vector.load %arg4[%c0_5, %c0_6] : memref<4x128xbf16, #tpu.memory_space<vmem>>, vector<4x128xbf16>
    tpu.vector_store %arg4[%c0_5, %c0_6], %9 {strides = array<i32>} : memref<4x128xbf16, #tpu.memory_space<vmem>>, vector<4x128xbf16>,
    return
  }
  func.func @transform_0(%arg0: i32) -> (i32, i32) {
    %c0_i32 = arith.constant 0 : i32
    %c0_i32_0 = arith.constant 0 : i32
    return %c0_i32, %arg0 : i32, i32
  }
  func.func @transform_1(%arg0: i32) -> (i32, i32) {
    %c0_i32 = arith.constant 0 : i32
    %c0_i32_0 = arith.constant 0 : i32
    %c0_i32_1 = arith.constant 0 : i32
    return %c0_i32, %c0_i32_0 : i32, i32
  }
  func.func @transform_2(%arg0: i32) -> (i32, i32) {
    %c0_i32 = arith.constant 0 : i32
    %c0_i32_0 = arith.constant 0 : i32
    %c0_i32_1 = arith.constant 0 : i32
    return %c0_i32, %c0_i32_0 : i32, i32
  }
  func.func @transform_3(%arg0: i32) -> (i32, i32) {
    %c0_i32 = arith.constant 0 : i32
    %c0_i32_0 = arith.constant 0 : i32
    return %c0_i32, %arg0 : i32, i32
  }
}

module attributes {stable_mosaic.version = 11 : i64} {
  func.func @_matmul_stats_kernel(%arg0: i32, %arg1: memref<16x128xbf16, #tpu.memory_space<vmem>>, %arg2: memref<4x16xbf16, #tpu.memory_space<vmem>>, %arg3: memref<4x128xf32, #tpu.memory_space<vmem>>, %arg4: memref<1x4x1xf32, #tpu.memory_space<vmem>>, %arg5: memref<1x4x1xf32, #tpu.memory_space<vmem>>) attributes {dimension_semantics = [#tpu.dimension_semantics<parallel>], iteration_bounds = array<i64: 1>, scalar_prefetch = 0 : i64, scratch_operands = 0 : i64, tpu.core_type = #tpu.core_type<tc>, window_params = [{transform_indices = @transform_0, window_bounds = array<i64: 16, 128>}, {pipeline_mode = #tpu.pipeline_mode<synchronous>, transform_indices = @transform_1, window_bounds = array<i64: 4, 16>}, {transform_indices = @transform_2, window_bounds = array<i64: 4, 128>}, {transform_indices = @transform_3, window_bounds = array<i64: 1, 4, 1>}, {transform_indices = @transform_4, window_bounds = array<i64: 1, 4, 1>}]} {
    %c0 = arith.constant 0 : index
    %c0_0 = arith.constant 0 : index
    %0 = vector.load %arg2[%c0, %c0_0] : memref<4x16xbf16, #tpu.memory_space<vmem>>, vector<4x16xbf16>
    %c0_1 = arith.constant 0 : index
    %c0_2 = arith.constant 0 : index
    %1 = vector.load %arg1[%c0_1, %c0_2] : memref<16x128xbf16, #tpu.memory_space<vmem>>, vector<16x128xbf16>
    %cst = arith.constant dense<0.000000e+00> : vector<4x128xf32>
    %2 = tpu.matmul %0, %1, %cst {dimension_numbers = #tpu.dot_dimension_numbers<[1], [0], [0], [1], [0, 0, 1, 1], [], []>} : vector<4x16xbf16>, vector<16x128xbf16>, vector<4x128xf32> -> vector<4x128xf32>
    %c0_3 = arith.constant 0 : index
    %c0_4 = arith.constant 0 : index
    %3 = vector.load %arg3[%c0_3, %c0_4] : memref<4x128xf32, #tpu.memory_space<vmem>>, vector<4x128xf32>
    tpu.vector_store %arg3[%c0_3, %c0_4], %2 {strides = array<i32>} : memref<4x128xf32, #tpu.memory_space<vmem>>, vector<4x128xf32>,
    %cst_5 = arith.constant dense<0.000000e+00> : vector<4xf32>
    %4 = vector.multi_reduction <add>, %2, %cst_5 [1] : vector<4x128xf32> to vector<4xf32>
    %5 = vector.shape_cast %4 : vector<4xf32> to vector<4x1xf32>
    %6 = vector.shape_cast %5 : vector<4x1xf32> to vector<1x4x1xf32>
    %c0_6 = arith.constant 0 : index
    %c0_7 = arith.constant 0 : index
    %c0_8 = arith.constant 0 : index
    %7 = vector.load %arg4[%c0_6, %c0_7, %c0_8] : memref<1x4x1xf32, #tpu.memory_space<vmem>>, vector<1x4x1xf32>
    tpu.vector_store %arg4[%c0_6, %c0_7, %c0_8], %6 {strides = array<i32>} : memref<1x4x1xf32, #tpu.memory_space<vmem>>, vector<1x4x1xf32>,
    %8 = arith.mulf %2, %2 : vector<4x128xf32>
    %cst_9 = arith.constant dense<0.000000e+00> : vector<4xf32>
    %9 = vector.multi_reduction <add>, %8, %cst_9 [1] : vector<4x128xf32> to vector<4xf32>
    %10 = vector.shape_cast %9 : vector<4xf32> to vector<4x1xf32>
    %11 = vector.shape_cast %10 : vector<4x1xf32> to vector<1x4x1xf32>
    %c0_10 = arith.constant 0 : index
    %c0_11 = arith.constant 0 : index
    %c0_12 = arith.constant 0 : index
    %12 = vector.load %arg5[%c0_10, %c0_11, %c0_12] : memref<1x4x1xf32, #tpu.memory_space<vmem>>, vector<1x4x1xf32>
    tpu.vector_store %arg5[%c0_10, %c0_11, %c0_12], %11 {strides = array<i32>} : memref<1x4x1xf32, #tpu.memory_space<vmem>>, vector<1x4x1xf32>,
    return
  }
  func.func @transform_0(%arg0: i32) -> (i32, i32) {
    %c0_i32 = arith.constant 0 : i32
    %c0_i32_0 = arith.constant 0 : i32
    return %c0_i32, %arg0 : i32, i32
  }
  func.func @transform_1(%arg0: i32) -> (i32, i32) {
    %c0_i32 = arith.constant 0 : i32
    %c0_i32_0 = arith.constant 0 : i32
    %c0_i32_1 = arith.constant 0 : i32
    return %c0_i32, %c0_i32_0 : i32, i32
  }
  func.func @transform_2(%arg0: i32) -> (i32, i32) {
    %c0_i32 = arith.constant 0 : i32
    %c0_i32_0 = arith.constant 0 : i32
    return %c0_i32, %arg0 : i32, i32
  }
  func.func @transform_3(%arg0: i32) -> (i32, i32, i32) {
    %c0_i32 = arith.constant 0 : i32
    %c0_i32_0 = arith.constant 0 : i32
    %c0_i32_1 = arith.constant 0 : i32
    return %arg0, %c0_i32, %c0_i32_0 : i32, i32, i32
  }
  func.func @transform_4(%arg0: i32) -> (i32, i32, i32) {
    %c0_i32 = arith.constant 0 : i32
    %c0_i32_0 = arith.constant 0 : i32
    %c0_i32_1 = arith.constant 0 : i32
    return %arg0, %c0_i32, %c0_i32_0 : i32, i32, i32
  }
}

module attributes {stable_mosaic.version = 11 : i64} {
  func.func @_matmul_stats_kernel(%arg0: i32, %arg1: memref<32x128xbf16, #tpu.memory_space<vmem>>, %arg2: memref<32x32xbf16, #tpu.memory_space<vmem>>, %arg3: memref<32x128xf32, #tpu.memory_space<vmem>>, %arg4: memref<1x32x1xf32, #tpu.memory_space<vmem>>, %arg5: memref<1x32x1xf32, #tpu.memory_space<vmem>>) attributes {dimension_semantics = [#tpu.dimension_semantics<parallel>], iteration_bounds = array<i64: 1>, scalar_prefetch = 0 : i64, scratch_operands = 0 : i64, tpu.core_type = #tpu.core_type<tc>, window_params = [{transform_indices = @transform_0, window_bounds = array<i64: 32, 128>}, {pipeline_mode = #tpu.pipeline_mode<synchronous>, transform_indices = @transform_1, window_bounds = array<i64: 32, 32>}, {transform_indices = @transform_2, window_bounds = array<i64: 32, 128>}, {transform_indices = @transform_3, window_bounds = array<i64: 1, 32, 1>}, {transform_indices = @transform_4, window_bounds = array<i64: 1, 32, 1>}]} {
    %c0 = arith.constant 0 : index
    %c0_0 = arith.constant 0 : index
    %0 = vector.load %arg2[%c0, %c0_0] : memref<32x32xbf16, #tpu.memory_space<vmem>>, vector<32x32xbf16>
    %c0_1 = arith.constant 0 : index
    %c0_2 = arith.constant 0 : index
    %1 = vector.load %arg1[%c0_1, %c0_2] : memref<32x128xbf16, #tpu.memory_space<vmem>>, vector<32x128xbf16>
    %cst = arith.constant dense<0.000000e+00> : vector<32x128xf32>
    %2 = tpu.matmul %0, %1, %cst {dimension_numbers = #tpu.dot_dimension_numbers<[1], [0], [0], [1], [0, 0, 1, 1], [], []>} : vector<32x32xbf16>, vector<32x128xbf16>, vector<32x128xf32> -> vector<32x128xf32>
    %c0_3 = arith.constant 0 : index
    %c0_4 = arith.constant 0 : index
    %3 = vector.load %arg3[%c0_3, %c0_4] : memref<32x128xf32, #tpu.memory_space<vmem>>, vector<32x128xf32>
    tpu.vector_store %arg3[%c0_3, %c0_4], %2 {strides = array<i32>} : memref<32x128xf32, #tpu.memory_space<vmem>>, vector<32x128xf32>,
    %cst_5 = arith.constant dense<0.000000e+00> : vector<32xf32>
    %4 = vector.multi_reduction <add>, %2, %cst_5 [1] : vector<32x128xf32> to vector<32xf32>
    %5 = vector.shape_cast %4 : vector<32xf32> to vector<32x1xf32>
    %6 = vector.shape_cast %5 : vector<32x1xf32> to vector<1x32x1xf32>
    %c0_6 = arith.constant 0 : index
    %c0_7 = arith.constant 0 : index
    %c0_8 = arith.constant 0 : index
    %7 = vector.load %arg4[%c0_6, %c0_7, %c0_8] : memref<1x32x1xf32, #tpu.memory_space<vmem>>, vector<1x32x1xf32>
    tpu.vector_store %arg4[%c0_6, %c0_7, %c0_8], %6 {strides = array<i32>} : memref<1x32x1xf32, #tpu.memory_space<vmem>>, vector<1x32x1xf32>,
    %8 = arith.mulf %2, %2 : vector<32x128xf32>
    %cst_9 = arith.constant dense<0.000000e+00> : vector<32xf32>
    %9 = vector.multi_reduction <add>, %8, %cst_9 [1] : vector<32x128xf32> to vector<32xf32>
    %10 = vector.shape_cast %9 : vector<32xf32> to vector<32x1xf32>
    %11 = vector.shape_cast %10 : vector<32x1xf32> to vector<1x32x1xf32>
    %c0_10 = arith.constant 0 : index
    %c0_11 = arith.constant 0 : index
    %c0_12 = arith.constant 0 : index
    %12 = vector.load %arg5[%c0_10, %c0_11, %c0_12] : memref<1x32x1xf32, #tpu.memory_space<vmem>>, vector<1x32x1xf32>
    tpu.vector_store %arg5[%c0_10, %c0_11, %c0_12], %11 {strides = array<i32>} : memref<1x32x1xf32, #tpu.memory_space<vmem>>, vector<1x32x1xf32>,
    return
  }
  func.func @transform_0(%arg0: i32) -> (i32, i32) {
    %c0_i32 = arith.constant 0 : i32
    %c0_i32_0 = arith.constant 0 : i32
    return %c0_i32, %arg0 : i32, i32
  }
  func.func @transform_1(%arg0: i32) -> (i32, i32) {
    %c0_i32 = arith.constant 0 : i32
    %c0_i32_0 = arith.constant 0 : i32
    %c0_i32_1 = arith.constant 0 : i32
    return %c0_i32, %c0_i32_0 : i32, i32
  }
  func.func @transform_2(%arg0: i32) -> (i32, i32) {
    %c0_i32 = arith.constant 0 : i32
    %c0_i32_0 = arith.constant 0 : i32
    return %c0_i32, %arg0 : i32, i32
  }
  func.func @transform_3(%arg0: i32) -> (i32, i32, i32) {
    %c0_i32 = arith.constant 0 : i32
    %c0_i32_0 = arith.constant 0 : i32
    %c0_i32_1 = arith.constant 0 : i32
    return %arg0, %c0_i32, %c0_i32_0 : i32, i32, i32
  }
  func.func @transform_4(%arg0: i32) -> (i32, i32, i32) {
    %c0_i32 = arith.constant 0 : i32
    %c0_i32_0 = arith.constant 0 : i32
    %c0_i32_1 = arith.constant 0 : i32
    return %arg0, %c0_i32, %c0_i32_0 : i32, i32, i32
  }
}

module attributes {stable_mosaic.version = 11 : i64} {
  func.func @_bnrelu_matmul_stats_kernel(%arg0: i32, %arg1: memref<4x512xf32, #tpu.memory_space<vmem>>, %arg2: memref<4x1xf32, #tpu.memory_space<vmem>>, %arg3: memref<4x1xf32, #tpu.memory_space<vmem>>, %arg4: memref<8x4xbf16, #tpu.memory_space<vmem>>, %arg5: memref<8x512xf32, #tpu.memory_space<vmem>>, %arg6: memref<1x8x1xf32, #tpu.memory_space<vmem>>, %arg7: memref<1x8x1xf32, #tpu.memory_space<vmem>>) attributes {dimension_semantics = [#tpu.dimension_semantics<parallel>], iteration_bounds = array<i64: 2>, scalar_prefetch = 0 : i64, scratch_operands = 0 : i64, tpu.core_type = #tpu.core_type<tc>, window_params = [{transform_indices = @transform_0, window_bounds = array<i64: 4, 512>}, {pipeline_mode = #tpu.pipeline_mode<synchronous>, transform_indices = @transform_1, window_bounds = array<i64: 4, 1>}, {pipeline_mode = #tpu.pipeline_mode<synchronous>, transform_indices = @transform_2, window_bounds = array<i64: 4, 1>}, {pipeline_mode = #tpu.pipeline_mode<synchronous>, transform_indices = @transform_3, window_bounds = array<i64: 8, 4>}, {transform_indices = @transform_4, window_bounds = array<i64: 8, 512>}, {transform_indices = @transform_5, window_bounds = array<i64: 1, 8, 1>}, {transform_indices = @transform_6, window_bounds = array<i64: 1, 8, 1>}]} {
    %c0 = arith.constant 0 : index
    %c0_0 = arith.constant 0 : index
    %0 = vector.load %arg1[%c0, %c0_0] : memref<4x512xf32, #tpu.memory_space<vmem>>, vector<4x512xf32>
    %c0_1 = arith.constant 0 : index
    %c0_2 = arith.constant 0 : index
    %1 = vector.load %arg2[%c0_1, %c0_2] : memref<4x1xf32, #tpu.memory_space<vmem>>, vector<4x1xf32>
    %2 = vector.broadcast %1 : vector<4x1xf32> to vector<4x512xf32>
    %3 = arith.mulf %0, %2 : vector<4x512xf32>
    %c0_3 = arith.constant 0 : index
    %c0_4 = arith.constant 0 : index
    %4 = vector.load %arg3[%c0_3, %c0_4] : memref<4x1xf32, #tpu.memory_space<vmem>>, vector<4x1xf32>
    %5 = vector.broadcast %4 : vector<4x1xf32> to vector<4x512xf32>
    %6 = arith.addf %3, %5 : vector<4x512xf32>
    %cst = arith.constant 0.000000e+00 : f32
    %7 = vector.broadcast %cst : f32 to vector<4x512xf32>
    %8 = arith.maximumf %6, %7 : vector<4x512xf32>
    %c0_5 = arith.constant 0 : index
    %c0_6 = arith.constant 0 : index
    %9 = vector.load %arg4[%c0_5, %c0_6] : memref<8x4xbf16, #tpu.memory_space<vmem>>, vector<8x4xbf16>
    %10 = arith.truncf %8 : vector<4x512xf32> to vector<4x512xbf16>
    %cst_7 = arith.constant dense<0.000000e+00> : vector<8x512xf32>
    %11 = tpu.matmul %9, %10, %cst_7 {dimension_numbers = #tpu.dot_dimension_numbers<[1], [0], [0], [1], [0, 0, 1, 1], [], []>} : vector<8x4xbf16>, vector<4x512xbf16>, vector<8x512xf32> -> vector<8x512xf32>
    %c0_8 = arith.constant 0 : index
    %c0_9 = arith.constant 0 : index
    %12 = vector.load %arg5[%c0_8, %c0_9] : memref<8x512xf32, #tpu.memory_space<vmem>>, vector<8x512xf32>
    tpu.vector_store %arg5[%c0_8, %c0_9], %11 {strides = array<i32>} : memref<8x512xf32, #tpu.memory_space<vmem>>, vector<8x512xf32>,
    %cst_10 = arith.constant dense<0.000000e+00> : vector<8xf32>
    %13 = vector.multi_reduction <add>, %11, %cst_10 [1] : vector<8x512xf32> to vector<8xf32>
    %14 = vector.shape_cast %13 : vector<8xf32> to vector<8x1xf32>
    %15 = vector.shape_cast %14 : vector<8x1xf32> to vector<1x8x1xf32>
    %c0_11 = arith.constant 0 : index
    %c0_12 = arith.constant 0 : index
    %c0_13 = arith.constant 0 : index
    %16 = vector.load %arg6[%c0_11, %c0_12, %c0_13] : memref<1x8x1xf32, #tpu.memory_space<vmem>>, vector<1x8x1xf32>
    tpu.vector_store %arg6[%c0_11, %c0_12, %c0_13], %15 {strides = array<i32>} : memref<1x8x1xf32, #tpu.memory_space<vmem>>, vector<1x8x1xf32>,
    %17 = arith.mulf %11, %11 : vector<8x512xf32>
    %cst_14 = arith.constant dense<0.000000e+00> : vector<8xf32>
    %18 = vector.multi_reduction <add>, %17, %cst_14 [1] : vector<8x512xf32> to vector<8xf32>
    %19 = vector.shape_cast %18 : vector<8xf32> to vector<8x1xf32>
    %20 = vector.shape_cast %19 : vector<8x1xf32> to vector<1x8x1xf32>
    %c0_15 = arith.constant 0 : index
    %c0_16 = arith.constant 0 : index
    %c0_17 = arith.constant 0 : index
    %21 = vector.load %arg7[%c0_15, %c0_16, %c0_17] : memref<1x8x1xf32, #tpu.memory_space<vmem>>, vector<1x8x1xf32>
    tpu.vector_store %arg7[%c0_15, %c0_16, %c0_17], %20 {strides = array<i32>} : memref<1x8x1xf32, #tpu.memory_space<vmem>>, vector<1x8x1xf32>,
    return
  }
  func.func @transform_0(%arg0: i32) -> (i32, i32) {
    %c0_i32 = arith.constant 0 : i32
    %c0_i32_0 = arith.constant 0 : i32
    return %c0_i32, %arg0 : i32, i32
  }
  func.func @transform_1(%arg0: i32) -> (i32, i32) {
    %c0_i32 = arith.constant 0 : i32
    %c0_i32_0 = arith.constant 0 : i32
    %c0_i32_1 = arith.constant 0 : i32
    return %c0_i32, %c0_i32_0 : i32, i32
  }
  func.func @transform_2(%arg0: i32) -> (i32, i32) {
    %c0_i32 = arith.constant 0 : i32
    %c0_i32_0 = arith.constant 0 : i32
    %c0_i32_1 = arith.constant 0 : i32
    return %c0_i32, %c0_i32_0 : i32, i32
  }
  func.func @transform_3(%arg0: i32) -> (i32, i32) {
    %c0_i32 = arith.constant 0 : i32
    %c0_i32_0 = arith.constant 0 : i32
    %c0_i32_1 = arith.constant 0 : i32
    return %c0_i32, %c0_i32_0 : i32, i32
  }
  func.func @transform_4(%arg0: i32) -> (i32, i32) {
    %c0_i32 = arith.constant 0 : i32
    %c0_i32_0 = arith.constant 0 : i32
    return %c0_i32, %arg0 : i32, i32
  }
  func.func @transform_5(%arg0: i32) -> (i32, i32, i32) {
    %c0_i32 = arith.constant 0 : i32
    %c0_i32_0 = arith.constant 0 : i32
    %c0_i32_1 = arith.constant 0 : i32
    return %arg0, %c0_i32, %c0_i32_0 : i32, i32, i32
  }
  func.func @transform_6(%arg0: i32) -> (i32, i32, i32) {
    %c0_i32 = arith.constant 0 : i32
    %c0_i32_0 = arith.constant 0 : i32
    %c0_i32_1 = arith.constant 0 : i32
    return %arg0, %c0_i32, %c0_i32_0 : i32, i32, i32
  }
}

module attributes {stable_mosaic.version = 11 : i64} {
  func.func @_bnrelu_kernel(%arg0: i32, %arg1: memref<8x512xf32, #tpu.memory_space<vmem>>, %arg2: memref<8x1xf32, #tpu.memory_space<vmem>>, %arg3: memref<8x1xf32, #tpu.memory_space<vmem>>, %arg4: memref<8x512xf32, #tpu.memory_space<vmem>>) attributes {dimension_semantics = [#tpu.dimension_semantics<parallel>], iteration_bounds = array<i64: 2>, scalar_prefetch = 0 : i64, scratch_operands = 0 : i64, tpu.core_type = #tpu.core_type<tc>, window_params = [{transform_indices = @transform_0, window_bounds = array<i64: 8, 512>}, {pipeline_mode = #tpu.pipeline_mode<synchronous>, transform_indices = @transform_1, window_bounds = array<i64: 8, 1>}, {pipeline_mode = #tpu.pipeline_mode<synchronous>, transform_indices = @transform_2, window_bounds = array<i64: 8, 1>}, {transform_indices = @transform_3, window_bounds = array<i64: 8, 512>}]} {
    %c0 = arith.constant 0 : index
    %c0_0 = arith.constant 0 : index
    %0 = vector.load %arg1[%c0, %c0_0] : memref<8x512xf32, #tpu.memory_space<vmem>>, vector<8x512xf32>
    %c0_1 = arith.constant 0 : index
    %c0_2 = arith.constant 0 : index
    %1 = vector.load %arg2[%c0_1, %c0_2] : memref<8x1xf32, #tpu.memory_space<vmem>>, vector<8x1xf32>
    %2 = vector.broadcast %1 : vector<8x1xf32> to vector<8x512xf32>
    %3 = arith.mulf %0, %2 : vector<8x512xf32>
    %c0_3 = arith.constant 0 : index
    %c0_4 = arith.constant 0 : index
    %4 = vector.load %arg3[%c0_3, %c0_4] : memref<8x1xf32, #tpu.memory_space<vmem>>, vector<8x1xf32>
    %5 = vector.broadcast %4 : vector<8x1xf32> to vector<8x512xf32>
    %6 = arith.addf %3, %5 : vector<8x512xf32>
    %cst = arith.constant 0.000000e+00 : f32
    %7 = vector.broadcast %cst : f32 to vector<8x512xf32>
    %8 = arith.maximumf %6, %7 : vector<8x512xf32>
    %c0_5 = arith.constant 0 : index
    %c0_6 = arith.constant 0 : index
    %9 = vector.load %arg4[%c0_5, %c0_6] : memref<8x512xf32, #tpu.memory_space<vmem>>, vector<8x512xf32>
    tpu.vector_store %arg4[%c0_5, %c0_6], %8 {strides = array<i32>} : memref<8x512xf32, #tpu.memory_space<vmem>>, vector<8x512xf32>,
    return
  }
  func.func @transform_0(%arg0: i32) -> (i32, i32) {
    %c0_i32 = arith.constant 0 : i32
    %c0_i32_0 = arith.constant 0 : i32
    return %c0_i32, %arg0 : i32, i32
  }
  func.func @transform_1(%arg0: i32) -> (i32, i32) {
    %c0_i32 = arith.constant 0 : i32
    %c0_i32_0 = arith.constant 0 : i32
    %c0_i32_1 = arith.constant 0 : i32
    return %c0_i32, %c0_i32_0 : i32, i32
  }
  func.func @transform_2(%arg0: i32) -> (i32, i32) {
    %c0_i32 = arith.constant 0 : i32
    %c0_i32_0 = arith.constant 0 : i32
    %c0_i32_1 = arith.constant 0 : i32
    return %c0_i32, %c0_i32_0 : i32, i32
  }
  func.func @transform_3(%arg0: i32) -> (i32, i32) {
    %c0_i32 = arith.constant 0 : i32
    %c0_i32_0 = arith.constant 0 : i32
    return %c0_i32, %arg0 : i32, i32
  }
}

</mosaic_0001>

<llo_original>
// kernel: decoder_block_forward.5
$region0: #{decoder_block_forward.5}
  #allocation0 [shape = 'u32[]', space=smem, size = 0x4, offset = 0x4, fixed_abs, tag = 'smem constant byte address 0x4 - core index']
  #allocation1 [shape = 'u32[72,128]{1,0:T(1,128)}', space=vmem, size = 0x9000, scoped, tag = 'internal scratch']
  %s0 = inlined_call_operand.vmem [shape: bf16[16,128], index: 0, kind: input, shape index: {}]
  %s1 = inlined_call_operand.vmem [shape: bf16[4,16], index: 1, kind: input, shape index: {}]
  %s2 = inlined_call_operand.vmem [shape: f32[4,128], index: 2, kind: output, shape index: {0}]
  %s3 = inlined_call_operand.vmem [shape: f32[1,4,1], index: 3, kind: output, shape index: {1}]
  %s4 = inlined_call_operand.vmem [shape: f32[1,4,1], index: 4, kind: output, shape index: {2}]
  %5 = xla_tuple %s2, %s3, %s4
  %s6 = sld [smem:[#allocation0]]
  $region34: #{decoder_block_forward.5} parent=0
    _
  %s8 = ssub.s32 1, %s6
  %s9 = scalar_select 0, %s8, %s6
  // Predicated region
  $region2: #{decoder_block_forward.5} parent=0 // pred_check
    _
  $region3: #{decoder_block_forward.5} parent=0 // pred_check_branch
    %11 = sbr.rel (0) target = $region5
  $region4: #{decoder_block_forward.5} parent=0 // pred_region
    _
  $region5: #{decoder_block_forward.5} parent=0 // pred_fallthru
    _
  // Predicated region
  $region6: #{decoder_block_forward.5} parent=0 // pred_check
    _
  $region7: #{decoder_block_forward.5} parent=0 // pred_check_branch
    %13 = sbr.rel (0) target = $region9
  $region8: #{decoder_block_forward.5} parent=0 // pred_region
    _
  $region9: #{decoder_block_forward.5} parent=0 // pred_fallthru
    _
  %v15 = vld [vmem:[%s1] sm:$0x3]
  %v16 = vld [vmem:[%s0] sm:$0xf]
  %v17 = vld [vmem:[%s0 + $0x4] sm:$0xf]
  %v20 = vunpack.c.l.b16 %v16
  %v21 = vunpack.c.l.b16 %v17
  %v22 = vpack.c.b16 %v21, %v20
  %vm24 = vcmask 130048
  %v26 = vsel %vm24, %v15, 0
  %28 = vmatpush.bf16.msra.mxu0 0
  %29 = vmatpush.bf16.msra.mxu0 0
  %30 = vmatpush.bf16.msra.mxu0 0
  %31 = vmatpush.bf16.msra.mxu0 0
  %32 = vmatpush.bf16.msra.mxu0 0
  %33 = vmatpush.bf16.msra.mxu0 0
  %34 = vmatpush.bf16.msra.mxu0 0
  %35 = vmatpush.bf16.msra.mxu0 %v22
  %36 = vmatmul.bf16.gmra.mxu0 %v26
  %v37 = vpop.f32.mrf.mxu0
  %v38 = vadd.f32 0.0, %v37
  %v39 = vpop.f32.mrf.mxu0
  %40 = vdwg.mxu0
  %41 = vst [vmem:[%s2] sm:$0xf] %v38
  %vm42 = vcmask 1043456
  %v43 = vsel %vm42, %v38, 0.0
  %44 = vadd.xlane.f32.xlu0 %v43
  %v45 = vpop.xlane.xlu0 %44
  %vm46 = vcmask 3072
  %47 = vst.msk [vmem:[%s3] sm:$0xf] %vm46, %v45
  %v48 = vmul.f32 %v38, %v38
  %v49 = vsel %vm42, %v48, 0.0
  %50 = vadd.xlane.f32.xlu0 %v49
  %v51 = vpop.xlane.xlu0 %50
  %52 = vst.msk [vmem:[%s4] sm:$0xf] %vm46, %v51
  // Predicated region
  $region10: #{decoder_block_forward.5} parent=0 // pred_check
    _
  $region11: #{decoder_block_forward.5} parent=0 // pred_check_branch
    %54 = sbr.rel (0) target = $region13
  $region12: #{decoder_block_forward.5} parent=0 // pred_region
    _
  $region13: #{decoder_block_forward.5} parent=0 // pred_fallthru
    _
  // Predicated region
  $region14: #{decoder_block_forward.5} parent=0 // pred_check
    _
  $region15: #{decoder_block_forward.5} parent=0 // pred_check_branch
    %56 = sbr.rel (0) target = $region17
  $region16: #{decoder_block_forward.5} parent=0 // pred_region
    _
  $region17: #{decoder_block_forward.5} parent=0 // pred_fallthru
    _
  // Predicated region
  $region18: #{decoder_block_forward.5} parent=0 // pred_check
    _
  $region19: #{decoder_block_forward.5} parent=0 // pred_check_branch
    %58 = sbr.rel (0) target = $region21
  $region20: #{decoder_block_forward.5} parent=0 // pred_region
    _
  $region21: #{decoder_block_forward.5} parent=0 // pred_fallthru
    _
  // Predicated region
  $region22: #{decoder_block_forward.5} parent=0 // pred_check
    _
  $region23: #{decoder_block_forward.5} parent=0 // pred_check_branch
    %60 = sbr.rel (0) target = $region25
  $region24: #{decoder_block_forward.5} parent=0 // pred_region
    _
  $region25: #{decoder_block_forward.5} parent=0 // pred_fallthru
    _
  // Predicated region
  $region26: #{decoder_block_forward.5} parent=0 // pred_check
    _
  $region27: #{decoder_block_forward.5} parent=0 // pred_check_branch
    %62 = sbr.rel (0) target = $region29
  $region28: #{decoder_block_forward.5} parent=0 // pred_region
    _
  $region29: #{decoder_block_forward.5} parent=0 // pred_fallthru
    _
  // Predicated region
  $region30: #{decoder_block_forward.5} parent=0 // pred_check
    _
  $region31: #{decoder_block_forward.5} parent=0 // pred_check_branch
    %64 = sbr.rel (0) target = $region33
  $region32: #{decoder_block_forward.5} parent=0 // pred_region
    _
  $region33: #{decoder_block_forward.5} parent=0 // pred_fallthru
    _

// kernel: decoder_block_forward.6
$region0: #{decoder_block_forward.6}
  #allocation0 [shape = 'u32[]', space=smem, size = 0x4, offset = 0x4, fixed_abs, tag = 'smem constant byte address 0x4 - core index']
  #allocation1 [shape = 'u32[72,128]{1,0:T(1,128)}', space=vmem, size = 0x9000, scoped, tag = 'internal scratch']
  %s0 = inlined_call_operand.vmem [shape: f32[4,128], index: 0, kind: input, shape index: {}]
  %s1 = inlined_call_operand.vmem [shape: f32[4,1], index: 1, kind: input, shape index: {}]
  %s2 = inlined_call_operand.vmem [shape: f32[4,1], index: 2, kind: input, shape index: {}]
  %s3 = inlined_call_operand.vmem [shape: bf16[4,128], index: 3, kind: output, shape index: {}]
  %s4 = sld [smem:[#allocation0]]
  $region22: #{decoder_block_forward.6} parent=0
    _
  %s6 = ssub.s32 1, %s4
  %s7 = scalar_select 0, %s6, %s4
  // Predicated region
  $region2: #{decoder_block_forward.6} parent=0 // pred_check
    _
  $region3: #{decoder_block_forward.6} parent=0 // pred_check_branch
    %9 = sbr.rel (0) target = $region5
  $region4: #{decoder_block_forward.6} parent=0 // pred_region
    _
  $region5: #{decoder_block_forward.6} parent=0 // pred_fallthru
    _
  // Predicated region
  $region6: #{decoder_block_forward.6} parent=0 // pred_check
    _
  $region7: #{decoder_block_forward.6} parent=0 // pred_check_branch
    %11 = sbr.rel (0) target = $region9
  $region8: #{decoder_block_forward.6} parent=0 // pred_region
    _
  $region9: #{decoder_block_forward.6} parent=0 // pred_fallthru
    _
  // Predicated region
  $region10: #{decoder_block_forward.6} parent=0 // pred_check
    _
  $region11: #{decoder_block_forward.6} parent=0 // pred_check_branch
    %13 = sbr.rel (0) target = $region13
  $region12: #{decoder_block_forward.6} parent=0 // pred_region
    _
  $region13: #{decoder_block_forward.6} parent=0 // pred_fallthru
    _
  %v14 = vld [vmem:[%s0] sm:$0xf]
  %v15 = vld [vmem:[%s1] sm:$0xf]
  %17 = vset.pattern.permute.xlu0 0
  %18 = vperm.xlu0 %17, %v15
  %v19 = vpop.permute.xlu0 %18
  %v21 = vmul.f32 %v14, %v19
  %v22 = vld [vmem:[%s2] sm:$0xf]
  %24 = vset.pattern.permute.xlu0 0
  %25 = vperm.xlu0 %24, %v22
  %v26 = vpop.permute.xlu0 %25
  %v28 = vadd.f32 %v21, %v26
  %v29 = vmax.f32 %v28, 0.0
  %v30 = vpack.c.bf16 %v29, %v29
  %31 = vst [vmem:[%s3] sm:$0x3] %v30
  // Predicated region
  $region14: #{decoder_block_forward.6} parent=0 // pred_check
    _
  $region15: #{decoder_block_forward.6} parent=0 // pred_check_branch
    %33 = sbr.rel (0) target = $region17
  $region16: #{decoder_block_forward.6} parent=0 // pred_region
    _
  $region17: #{decoder_block_forward.6} parent=0 // pred_fallthru
    _
  // Predicated region
  $region18: #{decoder_block_forward.6} parent=0 // pred_check
    _
  $region19: #{decoder_block_forward.6} parent=0 // pred_check_branch
    %35 = sbr.rel (0) target = $region21
  $region20: #{decoder_block_forward.6} parent=0 // pred_region
    _
  $region21: #{decoder_block_forward.6} parent=0 // pred_fallthru
    _

// kernel: squeeze.8
$region0: #{squeeze.8}
  %s0 = inlined_call_operand.vmem [shape: f32[32], index: 0, kind: input, shape index: {}]
  %s1 = inlined_call_operand.vmem [shape: f32[8,4], index: 1, kind: output, shape index: {}]
  $region1: #{squeeze.8} parent=0
    #allocation0 [shape = 'u8[4096]{0}', space=vmem, size = 0x1000, scoped, tag = 'scoped mem for input reshape']
    %s3 = ssub.s32 2, 1
    %v4 = vld [vmem:[%s0] sm:%s3]
    %5 = vst [vmem:[#allocation0] sm:%s3] %v4
    %v6 = vld [vmem:[#allocation0] sm:$0x1]
    %vm7 = vcmask 31744
    %8 = vst.msk [vmem:[%s1] sm:$0x1] %vm7, %v6
    %v9 = vld [vmem:[#allocation0] sm:$0x1]
    %10 = vrot.lane.b32.xlu0 %v9, 124
    %v11 = vpop.permute.xlu0 %10
    %vm12 = vcmask 31744
    %s13 = scalar_lea.vmem %s1, 1
    %14 = vst.msk [vmem:[%s13] sm:$0x1] %vm12, %v11
    %v15 = vld [vmem:[#allocation0] sm:$0x1]
    %16 = vrot.lane.b32.xlu0 %v15, 120
    %v17 = vpop.permute.xlu0 %16
    %vm18 = vcmask 31744
    %s19 = scalar_lea.vmem %s1, 2
    %20 = vst.msk [vmem:[%s19] sm:$0x1] %vm18, %v17
    %v21 = vld [vmem:[#allocation0] sm:$0x1]
    %22 = vrot.lane.b32.xlu0 %v21, 116
    %v23 = vpop.permute.xlu0 %22
    %vm24 = vcmask 31744
    %s25 = scalar_lea.vmem %s1, 3
    %26 = vst.msk [vmem:[%s25] sm:$0x1] %vm24, %v23
    %v27 = vld [vmem:[#allocation0] sm:$0x1]
    %28 = vrot.lane.b32.xlu0 %v27, 112
    %v29 = vpop.permute.xlu0 %28
    %vm30 = vcmask 31744
    %s31 = scalar_lea.vmem %s1, 4
    %32 = vst.msk [vmem:[%s31] sm:$0x1] %vm30, %v29
    %v33 = vld [vmem:[#allocation0] sm:$0x1]
    %34 = vrot.lane.b32.xlu0 %v33, 108
    %v35 = vpop.permute.xlu0 %34
    %vm36 = vcmask 31744
    %s37 = scalar_lea.vmem %s1, 5
    %38 = vst.msk [vmem:[%s37] sm:$0x1] %vm36, %v35
    %v39 = vld [vmem:[#allocation0] sm:$0x1]
    %40 = vrot.lane.b32.xlu0 %v39, 104
    %v41 = vpop.permute.xlu0 %40
    %vm42 = vcmask 31744
    %s43 = scalar_lea.vmem %s1, 6
    %44 = vst.msk [vmem:[%s43] sm:$0x1] %vm42, %v41
    %v45 = vld [vmem:[#allocation0] sm:$0x1]
    %46 = vrot.lane.b32.xlu0 %v45, 100
    %v47 = vpop.permute.xlu0 %46
    %vm48 = vcmask 31744
    %s49 = scalar_lea.vmem %s1, 7
    %50 = vst.msk [vmem:[%s49] sm:$0x1] %vm48, %v47

// kernel: decoder_block_forward.7
$region0: #{decoder_block_forward.7}
  #allocation0 [shape = 'u32[]', space=smem, size = 0x4, offset = 0x4, fixed_abs, tag = 'smem constant byte address 0x4 - core index']
  #allocation1 [shape = 'u32[72,128]{1,0:T(1,128)}', space=vmem, size = 0x9000, scoped, tag = 'internal scratch']
  %s0 = inlined_call_operand.vmem [shape: bf16[32,128], index: 0, kind: input, shape index: {}]
  %s1 = inlined_call_operand.vmem [shape: bf16[32,32], index: 1, kind: input, shape index: {}]
  %s2 = inlined_call_operand.vmem [shape: f32[32,128], index: 2, kind: output, shape index: {0}]
  %s3 = inlined_call_operand.vmem [shape: f32[1,32,1], index: 3, kind: output, shape index: {1}]
  %s4 = inlined_call_operand.vmem [shape: f32[1,32,1], index: 4, kind: output, shape index: {2}]
  %5 = xla_tuple %s2, %s3, %s4
  %s6 = sld [smem:[#allocation0]]
  $region34: #{decoder_block_forward.7} parent=0
    _
  %s8 = ssub.s32 1, %s6
  %s9 = scalar_select 0, %s8, %s6
  // Predicated region
  $region2: #{decoder_block_forward.7} parent=0 // pred_check
    _
  $region3: #{decoder_block_forward.7} parent=0 // pred_check_branch
    %11 = sbr.rel (0) target = $region5
  $region4: #{decoder_block_forward.7} parent=0 // pred_region
    _
  $region5: #{decoder_block_forward.7} parent=0 // pred_fallthru
    _
  // Predicated region
  $region6: #{decoder_block_forward.7} parent=0 // pred_check
    _
  $region7: #{decoder_block_forward.7} parent=0 // pred_check_branch
    %13 = sbr.rel (0) target = $region9
  $region8: #{decoder_block_forward.7} parent=0 // pred_region
    _
  $region9: #{decoder_block_forward.7} parent=0 // pred_fallthru
    _
  %v15 = vld [vmem:[%s1] sm:$0xf]
  %v16 = vld [vmem:[%s1 + $0x4] sm:$0xf]
  %v17 = vld [vmem:[%s1 + $0x8] sm:$0xf]
  %v18 = vld [vmem:[%s1 + $0xc] sm:$0xf]
  %v19 = vld [vmem:[%s0] sm:$0xf]
  %v20 = vld [vmem:[%s0 + $0x4] sm:$0xf]
  %v21 = vld [vmem:[%s0 + $0x8] sm:$0xf]
  %v22 = vld [vmem:[%s0 + $0xc] sm:$0xf]
  %v27 = vunpack.c.l.b16 %v15
  %v28 = vunpack.c.l.b16 %v16
  %v29 = vunpack.c.l.b16 %v17
  %v30 = vunpack.c.l.b16 %v18
  %v31 = vpack.c.b16 %v28, %v27
  %v32 = vpack.c.b16 %v30, %v29
  %v37 = vunpack.c.l.b16 %v19
  %v38 = vunpack.c.l.b16 %v20
  %v39 = vunpack.c.l.b16 %v21
  %v40 = vunpack.c.l.b16 %v22
  %v41 = vpack.c.b16 %v38, %v37
  %v42 = vpack.c.b16 %v40, %v39
  %vm45 = vcmask 261120
  %v47 = vsel %vm45, %v31, 0
  %v50 = vsel %vm45, %v32, 0
  %52 = vmatpush.bf16.msra.mxu0 0
  %53 = vmatpush.bf16.msra.mxu0 0
  %54 = vmatpush.bf16.msra.mxu0 0
  %55 = vmatpush.bf16.msra.mxu0 0
  %56 = vmatpush.bf16.msra.mxu0 0
  %57 = vmatpush.bf16.msra.mxu0 0
  %58 = vmatpush.bf16.msra.mxu0 %v42
  %59 = vmatpush.bf16.msra.mxu0 %v41
  %60 = vmatmul.bf16.gmra.mxu0 %v47
  %v61 = vpop.f32.mrf.mxu0
  %v62 = vadd.f32 0.0, %v61
  %v63 = vpop.f32.mrf.mxu0
  %v64 = vadd.f32 0.0, %v63
  %65 = vmatmul.bf16.gmra.mxu0 %v50
  %v66 = vpop.f32.mrf.mxu0
  %v67 = vadd.f32 0.0, %v66
  %v68 = vpop.f32.mrf.mxu0
  %v69 = vadd.f32 0.0, %v68
  %70 = vdwg.mxu0
  %71 = vst [vmem:[%s2] sm:$0xff] %v62
  %72 = vst [vmem:[%s2 + $0x8] sm:$0xff] %v64
  %73 = vst [vmem:[%s2 + $0x10] sm:$0xff] %v67
  %74 = vst [vmem:[%s2 + $0x18] sm:$0xff] %v69
  %75 = vadd.xlane.f32.xlu0 %v62
  %v76 = vpop.xlane.xlu0 %75
  %77 = vadd.xlane.f32.xlu0 %v64
  %v78 = vpop.xlane.xlu0 %77
  %79 = vadd.xlane.f32.xlu0 %v67
  %v80 = vpop.xlane.xlu0 %79
  %81 = vadd.xlane.f32.xlu0 %v69
  %v82 = vpop.xlane.xlu0 %81
  %vm83 = vcmask 7168
  %84 = vst.msk [vmem:[%s3] sm:$0xff] %vm83, %v76
  %85 = vst.msk [vmem:[%s3 + $0x8] sm:$0xff] %vm83, %v78
  %86 = vst.msk [vmem:[%s3 + $0x10] sm:$0xff] %vm83, %v80
  %87 = vst.msk [vmem:[%s3 + $0x18] sm:$0xff] %vm83, %v82
  %v88 = vmul.f32 %v62, %v62
  %v89 = vmul.f32 %v64, %v64
  %v90 = vmul.f32 %v67, %v67
  %v91 = vmul.f32 %v69, %v69
  %92 = vadd.xlane.f32.xlu0 %v88
  %v93 = vpop.xlane.xlu0 %92
  %94 = vadd.xlane.f32.xlu0 %v89
  %v95 = vpop.xlane.xlu0 %94
  %96 = vadd.xlane.f32.xlu0 %v90
  %v97 = vpop.xlane.xlu0 %96
  %98 = vadd.xlane.f32.xlu0 %v91
  %v99 = vpop.xlane.xlu0 %98
  %100 = vst.msk [vmem:[%s4] sm:$0xff] %vm83, %v93
  %101 = vst.msk [vmem:[%s4 + $0x8] sm:$0xff] %vm83, %v95
  %102 = vst.msk [vmem:[%s4 + $0x10] sm:$0xff] %vm83, %v97
  %103 = vst.msk [vmem:[%s4 + $0x18] sm:$0xff] %vm83, %v99
  // Predicated region
  $region10: #{decoder_block_forward.7} parent=0 // pred_check
    _
  $region11: #{decoder_block_forward.7} parent=0 // pred_check_branch
    %105 = sbr.rel (0) target = $region13
  $region12: #{decoder_block_forward.7} parent=0 // pred_region
    _
  $region13: #{decoder_block_forward.7} parent=0 // pred_fallthru
    _
  // Predicated region
  $region14: #{decoder_block_forward.7} parent=0 // pred_check
    _
  $region15: #{decoder_block_forward.7} parent=0 // pred_check_branch
    %107 = sbr.rel (0) target = $region17
  $region16: #{decoder_block_forward.7} parent=0 // pred_region
    _
  $region17: #{decoder_block_forward.7} parent=0 // pred_fallthru
    _
  // Predicated region
  $region18: #{decoder_block_forward.7} parent=0 // pred_check
    _
  $region19: #{decoder_block_forward.7} parent=0 // pred_check_branch
    %109 = sbr.rel (0) target = $region21
  $region20: #{decoder_block_forward.7} parent=0 // pred_region
    _
  $region21: #{decoder_block_forward.7} parent=0 // pred_fallthru
    _
  // Predicated region
  $region22: #{decoder_block_forward.7} parent=0 // pred_check
    _
  $region23: #{decoder_block_forward.7} parent=0 // pred_check_branch
    %111 = sbr.rel (0) target = $region25
  $region24: #{decoder_block_forward.7} parent=0 // pred_region
    _
  $region25: #{decoder_block_forward.7} parent=0 // pred_fallthru
    _
  // Predicated region
  $region26: #{decoder_block_forward.7} parent=0 // pred_check
    _
  $region27: #{decoder_block_forward.7} parent=0 // pred_check_branch
    %113 = sbr.rel (0) target = $region29
  $region28: #{decoder_block_forward.7} parent=0 // pred_region
    _
  $region29: #{decoder_block_forward.7} parent=0 // pred_fallthru
    _
  // Predicated region
  $region30: #{decoder_block_forward.7} parent=0 // pred_check
    _
  $region31: #{decoder_block_forward.7} parent=0 // pred_check_branch
    %115 = sbr.rel (0) target = $region33
  $region32: #{decoder_block_forward.7} parent=0 // pred_region
    _
  $region33: #{decoder_block_forward.7} parent=0 // pred_fallthru
    _

// kernel: decoder_block_forward.8
$region0: #{decoder_block_forward.8}
  #allocation0 [shape = 'u32[]', space=smem, size = 0x4, offset = 0x4, fixed_abs, tag = 'smem constant byte address 0x4 - core index']
  #allocation1 [shape = 'u32[72,128]{1,0:T(1,128)}', space=vmem, size = 0x9000, scoped, tag = 'internal scratch']
  %s0 = inlined_call_operand.vmem [shape: f32[4,1024], index: 0, kind: input, shape index: {}]
  %s1 = inlined_call_operand.vmem [shape: f32[4,1], index: 1, kind: input, shape index: {}]
  %s2 = inlined_call_operand.vmem [shape: f32[4,1], index: 2, kind: input, shape index: {}]
  %s3 = inlined_call_operand.vmem [shape: bf16[8,4], index: 3, kind: input, shape index: {}]
  %s4 = inlined_call_operand.vmem [shape: f32[8,1024], index: 4, kind: output, shape index: {0}]
  %s5 = inlined_call_operand.vmem [shape: f32[2,8,1], index: 5, kind: output, shape index: {1}]
  %s6 = inlined_call_operand.vmem [shape: f32[2,8,1], index: 6, kind: output, shape index: {2}]
  %7 = xla_tuple %s4, %s5, %s6
  %s8 = sld [smem:[#allocation0]]
  $region65: #{decoder_block_forward.8} parent=0
    _
  %s10 = ssub.s32 1, %s8
  %s11 = scalar_select 0, %s10, %s8
  loop: start=0, step=1, limit=4
  $region2: #{decoder_block_forward.8} parent=0 // loop_pre_header
    _
  $region3: #{decoder_block_forward.8} parent=0 // loop_header
    %s13 = sphi 0, %s17
    %p14 = scmp.ge.s32.totalorder %s13, 4
    %s23 = sphi 0, %s25
    %s26 = sphi 0, %s23
    %s27 = sphi 0, %s26
    %s43 = sphi 0, %s27
    %s47 = sphi 0, %s47
    %s49 = sphi 0, %s47
    %s50 = sphi 0, %s49
    %s64 = sphi 0, %s50
    %s68 = sphi 0, %s68
    %s70 = sphi 0, %s68
    %s71 = sphi 0, %s70
    %s85 = sphi 0, %s71
    %s89 = sphi 0, %s89
    %s91 = sphi 0, %s89
    %s92 = sphi 0, %s91
    %s106 = sphi 0, %s92
    %s112 = sphi 0, %s114
    %s115 = sphi 0, %s112
    %s116 = sphi 0, %s115
    %s132 = sphi 0, %s116
    %s138 = sphi 0, %s140
    %s141 = sphi 0, %s138
    %s142 = sphi 0, %s141
    %s158 = sphi 0, %s142
    %s164 = sphi 0, %s166
    %s167 = sphi 0, %s164
    %s168 = sphi 0, %s167
    %s184 = sphi 0, %s168
  $region4: #{decoder_block_forward.8} parent=0 // loop_header_branch
    %16 = sbr.rel (%p14) target = $region8
  $region5: #{decoder_block_forward.8} parent=0 // loop_body
    %s18 = ssub.s32 %s13, 1
    %s19 = ssub.s32 %s13, 2
    %s20 = sadd.s32 %s13, 1
    %s21 = ssub.s32 %s13, %s20
    %p22 = scmp.eq.s32.totalorder %s21, 0
    %s24 = sadd.s32 %s23, 1
    %s25 = scalar_select %p22, %s23, %s24
    %p28 = pneg %p22
    %p29 = scmp.eq.s32.totalorder %s13, 1
    %p30 = por %p28, %p29
    %p31 = scmp.ne.s32.totalorder %s23, %s26
    %p32 = scmp.eq.s32.totalorder %s13, 0
    %p33 = por %p31, %p32
    %p34 = scmp.ne.s32.totalorder %s23, %s26
    %p35 = scmp.eq.s32.totalorder %s18, 1
    %p36 = por %p34, %p35
    %p37 = scmp.ne.s32.totalorder %s26, %s27
    %p38 = scmp.eq.s32.totalorder %s18, 0
    %p39 = por %p37, %p38
    %p40 = scmp.ne.s32.totalorder %s26, %s27
    %p41 = scmp.eq.s32.totalorder %s19, 1
    %p42 = por %p40, %p41
    %p44 = scmp.ne.s32.totalorder %s27, %s43
    %p45 = scmp.eq.s32.totalorder %s19, 0
    %p46 = por %p44, %p45
    %s48 = sadd.s32 %s47, 1
    %p51 = scmp.eq.s32.totalorder %s13, 1
    %p52 = scmp.ne.s32.totalorder %s47, %s49
    %p53 = scmp.eq.s32.totalorder %s13, 0
    %p54 = por %p52, %p53
    %p55 = scmp.ne.s32.totalorder %s47, %s49
    %p56 = scmp.eq.s32.totalorder %s18, 1
    %p57 = por %p55, %p56
    %p58 = scmp.ne.s32.totalorder %s49, %s50
    %p59 = scmp.eq.s32.totalorder %s18, 0
    %p60 = por %p58, %p59
    %p61 = scmp.ne.s32.totalorder %s49, %s50
    %p62 = scmp.eq.s32.totalorder %s19, 1
    %p63 = por %p61, %p62
    %p65 = scmp.ne.s32.totalorder %s50, %s64
    %p66 = scmp.eq.s32.totalorder %s19, 0
    %p67 = por %p65, %p66
    %s69 = sadd.s32 %s68, 1
    %p72 = scmp.eq.s32.totalorder %s13, 1
    %p73 = scmp.ne.s32.totalorder %s68, %s70
    %p74 = scmp.eq.s32.totalorder %s13, 0
    %p75 = por %p73, %p74
    %p76 = scmp.ne.s32.totalorder %s68, %s70
    %p77 = scmp.eq.s32.totalorder %s18, 1
    %p78 = por %p76, %p77
    %p79 = scmp.ne.s32.totalorder %s70, %s71
    %p80 = scmp.eq.s32.totalorder %s18, 0
    %p81 = por %p79, %p80
    %p82 = scmp.ne.s32.totalorder %s70, %s71
    %p83 = scmp.eq.s32.totalorder %s19, 1
    %p84 = por %p82, %p83
    %p86 = scmp.ne.s32.totalorder %s71, %s85
    %p87 = scmp.eq.s32.totalorder %s19, 0
    %p88 = por %p86, %p87
    %s90 = sadd.s32 %s89, 1
    %p93 = scmp.eq.s32.totalorder %s13, 1
    %p94 = scmp.ne.s32.totalorder %s89, %s91
    %p95 = scmp.eq.s32.totalorder %s13, 0
    %p96 = por %p94, %p95
    %p97 = scmp.ne.s32.totalorder %s89, %s91
    %p98 = scmp.eq.s32.totalorder %s18, 1
    %p99 = por %p97, %p98
    %p100 = scmp.ne.s32.totalorder %s91, %s92
    %p101 = scmp.eq.s32.totalorder %s18, 0
    %p102 = por %p100, %p101
    %p103 = scmp.ne.s32.totalorder %s91, %s92
    %p104 = scmp.eq.s32.totalorder %s19, 1
    %p105 = por %p103, %p104
    %p107 = scmp.ne.s32.totalorder %s92, %s106
    %p108 = scmp.eq.s32.totalorder %s19, 0
    %p109 = por %p107, %p108
    %s110 = ssub.s32 %s13, %s20
    %p111 = scmp.eq.s32.totalorder %s110, 0
    %s113 = sadd.s32 %s112, 1
    %s114 = scalar_select %p111, %s112, %s113
    %p117 = pneg %p111
    %p118 = scmp.eq.s32.totalorder %s13, 1
    %p119 = por %p117, %p118
    %p120 = scmp.ne.s32.totalorder %s112, %s115
    %p121 = scmp.eq.s32.totalorder %s13, 0
    %p122 = por %p120, %p121
    %p123 = scmp.ne.s32.totalorder %s112, %s115
    %p124 = scmp.eq.s32.totalorder %s18, 1
    %p125 = por %p123, %p124
    %p126 = scmp.ne.s32.totalorder %s115, %s116
    %p127 = scmp.eq.s32.totalorder %s18, 0
    %p128 = por %p126, %p127
    %p129 = scmp.ne.s32.totalorder %s115, %s116
    %p130 = scmp.eq.s32.totalorder %s19, 1
    %p131 = por %p129, %p130
    %p133 = scmp.ne.s32.totalorder %s116, %s132
    %p134 = scmp.eq.s32.totalorder %s19, 0
    %p135 = por %p133, %p134
    %s136 = ssub.s32 %s13, %s20
    %p137 = scmp.eq.s32.totalorder %s136, 0
    %s139 = sadd.s32 %s138, 1
    %s140 = scalar_select %p137, %s138, %s139
    %p143 = pneg %p137
    %p144 = scmp.eq.s32.totalorder %s13, 1
    %p145 = por %p143, %p144
    %p146 = scmp.ne.s32.totalorder %s138, %s141
    %p147 = scmp.eq.s32.totalorder %s13, 0
    %p148 = por %p146, %p147
    %p149 = scmp.ne.s32.totalorder %s138, %s141
    %p150 = scmp.eq.s32.totalorder %s18, 1
    %p151 = por %p149, %p150
    %p152 = scmp.ne.s32.totalorder %s141, %s142
    %p153 = scmp.eq.s32.totalorder %s18, 0
    %p154 = por %p152, %p153
    %p155 = scmp.ne.s32.totalorder %s141, %s142
    %p156 = scmp.eq.s32.totalorder %s19, 1
    %p157 = por %p155, %p156
    %p159 = scmp.ne.s32.totalorder %s142, %s158
    %p160 = scmp.eq.s32.totalorder %s19, 0
    %p161 = por %p159, %p160
    %s162 = ssub.s32 %s13, %s20
    %p163 = scmp.eq.s32.totalorder %s162, 0
    %s165 = sadd.s32 %s164, 1
    %s166 = scalar_select %p163, %s164, %s165
    %p169 = pneg %p163
    %p170 = scmp.eq.s32.totalorder %s13, 1
    %p171 = por %p169, %p170
    %p172 = scmp.ne.s32.totalorder %s164, %s167
    %p173 = scmp.eq.s32.totalorder %s13, 0
    %p174 = por %p172, %p173
    %p175 = scmp.ne.s32.totalorder %s164, %s167
    %p176 = scmp.eq.s32.totalorder %s18, 1
    %p177 = por %p175, %p176
    %p178 = scmp.ne.s32.totalorder %s167, %s168
    %p179 = scmp.eq.s32.totalorder %s18, 0
    %p180 = por %p178, %p179
    %p181 = scmp.ne.s32.totalorder %s167, %s168
    %p182 = scmp.eq.s32.totalorder %s19, 1
    %p183 = por %p181, %p182
    %p185 = scmp.ne.s32.totalorder %s168, %s184
    %p186 = scmp.eq.s32.totalorder %s19, 0
    %p187 = por %p185, %p186
    %p188 = scmp.le.s32.totalorder 1, %s13
    %p189 = scmp.lt.s32.totalorder %s13, 3
    %p190 = pnand %p188, %p189
    %p191 = pneg %p190
    // Predicated region
    $region9: #{decoder_block_forward.8} parent=5 // pred_check
      _
    $region10: #{decoder_block_forward.8} parent=5 // pred_check_branch
      %193 = sbr.rel (%p190) target = $region12
    $region11: #{decoder_block_forward.8} parent=5 // pred_region
      %s194 = ssub.s32 %s13, 1
      // Predicated region
      $region13: #{decoder_block_forward.8} parent=11 // pred_check
        %p195 = pneg %p60
      $region14: #{decoder_block_forward.8} parent=11 // pred_check_branch
        %197 = sbr.rel (%p195) target = $region16
      $region15: #{decoder_block_forward.8} parent=11 // pred_region
        _
      $region16: #{decoder_block_forward.8} parent=11 // pred_fallthru
        _
      // Predicated region
      $region17: #{decoder_block_forward.8} parent=11 // pred_check
        %p198 = pneg %p81
      $region18: #{decoder_block_forward.8} parent=11 // pred_check_branch
        %200 = sbr.rel (%p198) target = $region20
      $region19: #{decoder_block_forward.8} parent=11 // pred_region
        _
      $region20: #{decoder_block_forward.8} parent=11 // pred_fallthru
        _
      // Predicated region
      $region21: #{decoder_block_forward.8} parent=11 // pred_check
        %p201 = pneg %p102
      $region22: #{decoder_block_forward.8} parent=11 // pred_check_branch
        %203 = sbr.rel (%p201) target = $region24
      $region23: #{decoder_block_forward.8} parent=11 // pred_region
        _
      $region24: #{decoder_block_forward.8} parent=11 // pred_fallthru
        _
    $region12: #{decoder_block_forward.8} parent=5 // pred_fallthru
      _
    %p204 = scmp.lt.s32.totalorder %s13, 2
    // Predicated region
    $region25: #{decoder_block_forward.8} parent=5 // pred_check
      %p205 = pneg %p204
    $region26: #{decoder_block_forward.8} parent=5 // pred_check_branch
      %207 = sbr.rel (%p205) target = $region28
    $region27: #{decoder_block_forward.8} parent=5 // pred_region
      // Predicated region
      $region29: #{decoder_block_forward.8} parent=27 // pred_check
        %p208 = pneg %p33
      $region30: #{decoder_block_forward.8} parent=27 // pred_check_branch
        %210 = sbr.rel (%p208) target = $region32
      $region31: #{decoder_block_forward.8} parent=27 // pred_region
        %s211 = smul.u32 4, %s13
        %p212 = scmp.lt.s32.totalorder %s211, 7
        %s213 = scalar_select %p212, %s211, 7
        %s214 = smul.addr %s213, 4
        %s215 = scalar_lea.vmem %s0, %s214
        %s216 = smul.u32 4, %s13
      $region32: #{decoder_block_forward.8} parent=27 // pred_fallthru
        _
    $region28: #{decoder_block_forward.8} parent=5 // pred_fallthru
      _
    %p217 = scmp.le.s32.totalorder 1, %s13
    %p218 = scmp.lt.s32.totalorder %s13, 3
    %p219 = pnand %p217, %p218
    %p220 = pneg %p219
    // Predicated region
    $region33: #{decoder_block_forward.8} parent=5 // pred_check
      _
    $region34: #{decoder_block_forward.8} parent=5 // pred_check_branch
      %222 = sbr.rel (%p219) target = $region36
    $region35: #{decoder_block_forward.8} parent=5 // pred_region
      %s223 = ssub.s32 %s13, 1
      %s224 = smul.u32 4, %s18
      %p225 = scmp.lt.s32.totalorder %s224, 7
      %s226 = scalar_select %p225, %s224, 7
      %s227 = smul.addr %s226, 4
      %s228 = scalar_lea.vmem %s0, %s227
      %p229 = pneg %p39
      %p230 = pneg %p36
      %p231 = pneg %p60
      %p232 = pneg %p57
      %p233 = pneg %p81
      %p234 = pneg %p78
      %p235 = pneg %p102
      %p236 = pneg %p99
      %p237 = pneg %p128
      %p238 = pneg %p125
      %s239 = smul.u32 4, %s18
      %p240 = scmp.lt.s32.totalorder %s239, 7
      %s241 = scalar_select %p240, %s239, 7
      %s242 = smul.addr %s241, 8
      %s243 = scalar_lea.vmem %s4, %s242
      %p244 = pneg %p154
      %p245 = pneg %p151
      %p246 = scmp.lt.s32.totalorder %s18, 1
      %s247 = scalar_select %p246, %s18, 1
      %s248 = smul.addr %s247, 8
      %s249 = scalar_lea.vmem %s5, %s248
      %p250 = pneg %p180
      %p251 = pneg %p177
      %p252 = scmp.lt.s32.totalorder %s18, 1
      %s253 = scalar_select %p252, %s18, 1
      %s254 = smul.addr %s253, 8
      %s255 = scalar_lea.vmem %s6, %s254
      %s256 = smul.u32 4, %s18
      %p257 = scmp.lt.s32.totalorder %s256, 7
      %s258 = scalar_select %p257, %s256, 7
      %s259 = smul.addr %s258, 4
      %s260 = scalar_lea.vmem %s0, %s259
      %s261 = smul.u32 4, %s18
      %s262 = smul.u32 4, %s18
      %p263 = scmp.lt.s32.totalorder %s262, 7
      %s264 = scalar_select %p263, %s262, 7
      %s265 = smul.addr %s264, 8
      %s266 = scalar_lea.vmem %s4, %s265
      %s267 = smul.u32 4, %s18
      %p268 = scmp.lt.s32.totalorder %s18, 1
      %s269 = scalar_select %p268, %s18, 1
      %s270 = smul.addr %s269, 8
      %s271 = scalar_lea.vmem %s5, %s270
      %p272 = scmp.lt.s32.totalorder %s18, 1
      %s273 = scalar_select %p272, %s18, 1
      %s274 = smul.addr %s273, 8
      %s275 = scalar_lea.vmem %s6, %s274
      %v277 = vld [vmem:[%s260] sm:$0xff]
      %v278 = vld [vmem:[%s260 + $0x8] sm:$0xff]
      %v279 = vld [vmem:[%s1] sm:$0xf]
      %281 = vset.pattern.permute.xlu0 0
      %282 = vperm.xlu0 %281, %v279
      %v283 = vpop.permute.xlu0 %282
      %v285 = vunpack.c.l.s4 839922192
      %v286 = vunpack.c.0.s8 %v285
      %v287 = vperm.slane %v283, %v286
      %v289 = vmul.f32 %v277, %v287
      %v290 = vmul.f32 %v278, %v287
      %v291 = vld [vmem:[%s2] sm:$0xf]
      %293 = vset.pattern.permute.xlu0 0
      %294 = vperm.xlu0 %293, %v291
      %v295 = vpop.permute.xlu0 %294
      %v297 = vunpack.c.l.s4 839922192
      %v298 = vunpack.c.0.s8 %v297
      %v299 = vperm.slane %v295, %v298
      %v301 = vadd.f32 %v289, %v299
      %v302 = vadd.f32 %v290, %v299
      %v303 = vmax.f32 %v301, 0.0
      %v304 = vmax.f32 %v302, 0.0
      %v305 = vld [vmem:[%s3] sm:$0xf]
      %308 = vst [vmem:[#allocation1] ss:$2 sm:$0xff] %v303
      %s309 = scalar_lea.vmem [#allocation1], 16
      %310 = vst [vmem:[%s309] ss:$2 sm:$0xff] %v304
      %v311 = vld.sshfl [vmem:[#allocation1] sm:$0xff pattern:$0x75316420]
      %v312 = vld.sshfl [vmem:[#allocation1 + $0x8] sm:$0xff pattern:$0x75316420]
      %v313 = vld.sshfl [vmem:[#allocation1 + $0x10] sm:$0xff pattern:$0x75316420]
      %v314 = vld.sshfl [vmem:[#allocation1 + $0x18] sm:$0xff pattern:$0x75316420]
      %v319 = vpack.c.bf16 %v311, %v311
      %v320 = vpack.c.bf16 %v312, %v312
      %v321 = vpack.c.bf16 %v313, %v313
      %v322 = vpack.c.bf16 %v314, %v314
      %vm323 = vcmask 31744
      %v325 = vsel %vm323, %v305, 0
      %vm327 = vcmask 1041408
      %v329 = vsel %vm327, %v319, 0
      %v332 = vsel %vm327, %v320, 0
      %v335 = vsel %vm327, %v321, 0
      %v338 = vsel %vm327, %v322, 0
      %340 = vmatpush.bf16.msra.mxu0 0
      %341 = vmatpush.bf16.msra.mxu0 0
      %342 = vmatpush.bf16.msra.mxu0 0
      %343 = vmatpush.bf16.msra.mxu0 0
      %344 = vmatpush.bf16.msra.mxu0 0
      %345 = vmatpush.bf16.msra.mxu0 0
      %346 = vmatpush.bf16.msra.mxu0 0
      %347 = vmatpush.bf16.msra.mxu0 %v329
      %348 = vmatmul.bf16.gmra.mxu0 %v325
      %v349 = vpop.f32.mrf.mxu0
      %v350 = vadd.f32 0.0, %v349
      %v351 = vpop.f32.mrf.mxu0
      %352 = vdwg.mxu0
      %353 = vmatpush.bf16.msra.mxu0 0
      %354 = vmatpush.bf16.msra.mxu0 0
      %355 = vmatpush.bf16.msra.mxu0 0
      %356 = vmatpush.bf16.msra.mxu0 0
      %357 = vmatpush.bf16.msra.mxu0 0
      %358 = vmatpush.bf16.msra.mxu0 0
      %359 = vmatpush.bf16.msra.mxu0 0
      %360 = vmatpush.bf16.msra.mxu0 %v332
      %361 = vmatmul.bf16.gmra.mxu0 %v325
      %v362 = vpop.f32.mrf.mxu0
      %v363 = vadd.f32 0.0, %v362
      %v364 = vpop.f32.mrf.mxu0
      %365 = vdwg.mxu0
      %366 = vmatpush.bf16.msra.mxu0 0
      %367 = vmatpush.bf16.msra.mxu0 0
      %368 = vmatpush.bf16.msra.mxu0 0
      %369 = vmatpush.bf16.msra.mxu0 0
      %370 = vmatpush.bf16.msra.mxu0 0
      %371 = vmatpush.bf16.msra.mxu0 0
      %372 = vmatpush.bf16.msra.mxu0 0
      %373 = vmatpush.bf16.msra.mxu0 %v335
      %374 = vmatmul.bf16.gmra.mxu0 %v325
      %v375 = vpop.f32.mrf.mxu0
      %v376 = vadd.f32 0.0, %v375
      %v377 = vpop.f32.mrf.mxu0
      %378 = vdwg.mxu0
      %379 = vmatpush.bf16.msra.mxu0 0
      %380 = vmatpush.bf16.msra.mxu0 0
      %381 = vmatpush.bf16.msra.mxu0 0
      %382 = vmatpush.bf16.msra.mxu0 0
      %383 = vmatpush.bf16.msra.mxu0 0
      %384 = vmatpush.bf16.msra.mxu0 0
      %385 = vmatpush.bf16.msra.mxu0 0
      %386 = vmatpush.bf16.msra.mxu0 %v338
      %387 = vmatmul.bf16.gmra.mxu0 %v325
      %v388 = vpop.f32.mrf.mxu0
      %v389 = vadd.f32 0.0, %v388
      %v390 = vpop.f32.mrf.mxu0
      %391 = vdwg.mxu0
      %392 = vst [vmem:[%s266] sm:$0xff] %v350
      %393 = vst [vmem:[%s266 + $0x8] sm:$0xff] %v363
      %394 = vst [vmem:[%s266 + $0x10] sm:$0xff] %v376
      %395 = vst [vmem:[%s266 + $0x18] sm:$0xff] %v389
      %v396 = vadd.f32 %v350, %v363
      %v397 = vadd.f32 %v396, %v376
      %v398 = vadd.f32 %v397, %v389
      %399 = vadd.xlane.f32.xlu0 %v398
      %v400 = vpop.xlane.xlu0 %399
      %vm401 = vcmask 7168
      %402 = vst.msk [vmem:[%s271] sm:$0xff] %vm401, %v400
      %v403 = vmul.f32 %v350, %v350
      %v404 = vmul.f32 %v363, %v363
      %v405 = vmul.f32 %v376, %v376
      %v406 = vmul.f32 %v389, %v389
      %v407 = vadd.f32 %v403, %v404
      %v408 = vadd.f32 %v407, %v405
      %v409 = vadd.f32 %v408, %v406
      %410 = vadd.xlane.f32.xlu0 %v409
      %v411 = vpop.xlane.xlu0 %410
      %412 = vst.msk [vmem:[%s275] sm:$0xff] %vm401, %v411
      %s413 = smul.u32 4, %s18
      %p414 = scmp.lt.s32.totalorder %s413, 7
      %s415 = scalar_select %p414, %s413, 7
      %s416 = smul.addr %s415, 8
      %s417 = scalar_lea.vmem %s4, %s416
      %p418 = scmp.lt.s32.totalorder %s18, 1
      %s419 = scalar_select %p418, %s18, 1
      %s420 = smul.addr %s419, 8
      %s421 = scalar_lea.vmem %s5, %s420
      %p422 = scmp.lt.s32.totalorder %s18, 1
      %s423 = scalar_select %p422, %s18, 1
      %s424 = smul.addr %s423, 8
      %s425 = scalar_lea.vmem %s6, %s424
      // Predicated region
      $region37: #{decoder_block_forward.8} parent=35 // pred_check
        %p426 = pneg %p125
      $region38: #{decoder_block_forward.8} parent=35 // pred_check_branch
        %428 = sbr.rel (%p426) target = $region40
      $region39: #{decoder_block_forward.8} parent=35 // pred_region
        %s429 = smul.u32 4, %s18
      $region40: #{decoder_block_forward.8} parent=35 // pred_fallthru
        _
      // Predicated region
      $region41: #{decoder_block_forward.8} parent=35 // pred_check
        %p430 = pneg %p151
      $region42: #{decoder_block_forward.8} parent=35 // pred_check_branch
        %432 = sbr.rel (%p430) target = $region44
      $region43: #{decoder_block_forward.8} parent=35 // pred_region
        _
      $region44: #{decoder_block_forward.8} parent=35 // pred_fallthru
        _
      // Predicated region
      $region45: #{decoder_block_forward.8} parent=35 // pred_check
        %p433 = pneg %p177
      $region46: #{decoder_block_forward.8} parent=35 // pred_check_branch
        %435 = sbr.rel (%p433) target = $region48
      $region47: #{decoder_block_forward.8} parent=35 // pred_region
        _
      $region48: #{decoder_block_forward.8} parent=35 // pred_fallthru
        _
    $region36: #{decoder_block_forward.8} parent=5 // pred_fallthru
      _
    %p436 = scmp.le.s32.totalorder 2, %s13
    // Predicated region
    $region49: #{decoder_block_forward.8} parent=5 // pred_check
      %p437 = pneg %p436
    $region50: #{decoder_block_forward.8} parent=5 // pred_check_branch
      %439 = sbr.rel (%p437) target = $region52
    $region51: #{decoder_block_forward.8} parent=5 // pred_region
      %s440 = ssub.s32 %s13, 2
      // Predicated region
      $region53: #{decoder_block_forward.8} parent=51 // pred_check
        %p441 = pneg %p131
      $region54: #{decoder_block_forward.8} parent=51 // pred_check_branch
        %443 = sbr.rel (%p441) target = $region56
      $region55: #{decoder_block_forward.8} parent=51 // pred_region
        %s444 = smul.u32 4, %s19
        %p445 = scmp.lt.s32.totalorder %s444, 7
        %s446 = scalar_select %p445, %s444, 7
        %s447 = smul.addr %s446, 8
        %s448 = scalar_lea.vmem %s4, %s447
      $region56: #{decoder_block_forward.8} parent=51 // pred_fallthru
        _
      // Predicated region
      $region57: #{decoder_block_forward.8} parent=51 // pred_check
        %p449 = pneg %p157
      $region58: #{decoder_block_forward.8} parent=51 // pred_check_branch
        %451 = sbr.rel (%p449) target = $region60
      $region59: #{decoder_block_forward.8} parent=51 // pred_region
        %p452 = scmp.lt.s32.totalorder %s19, 1
        %s453 = scalar_select %p452, %s19, 1
        %s454 = smul.addr %s453, 8
        %s455 = scalar_lea.vmem %s5, %s454
      $region60: #{decoder_block_forward.8} parent=51 // pred_fallthru
        _
      // Predicated region
      $region61: #{decoder_block_forward.8} parent=51 // pred_check
        %p456 = pneg %p183
      $region62: #{decoder_block_forward.8} parent=51 // pred_check_branch
        %458 = sbr.rel (%p456) target = $region64
      $region63: #{decoder_block_forward.8} parent=51 // pred_region
        %p459 = scmp.lt.s32.totalorder %s19, 1
        %s460 = scalar_select %p459, %s19, 1
        %s461 = smul.addr %s460, 8
        %s462 = scalar_lea.vmem %s6, %s461
      $region64: #{decoder_block_forward.8} parent=51 // pred_fallthru
        _
    $region52: #{decoder_block_forward.8} parent=5 // pred_fallthru
      _
  $region6: #{decoder_block_forward.8} parent=0 // loop_footer
    %s17 = sadd.s32 1, %s13
  $region7: #{decoder_block_forward.8} parent=0 // loop_footer_branch
    %12 = sbr.rel target = $region3
  $region8: #{decoder_block_forward.8} parent=0 // loop_exit
    _

// kernel: decoder_block_forward.9
$region0: #{decoder_block_forward.9}
  #allocation0 [shape = 'u32[]', space=smem, size = 0x4, offset = 0x4, fixed_abs, tag = 'smem constant byte address 0x4 - core index']
  #allocation1 [shape = 'u32[72,128]{1,0:T(1,128)}', space=vmem, size = 0x9000, scoped, tag = 'internal scratch']
  %s0 = inlined_call_operand.vmem [shape: f32[8,1024], index: 0, kind: input, shape index: {}]
  %s1 = inlined_call_operand.vmem [shape: f32[8,1], index: 1, kind: input, shape index: {}]
  %s2 = inlined_call_operand.vmem [shape: f32[8,1], index: 2, kind: input, shape index: {}]
  %s3 = inlined_call_operand.vmem [shape: f32[8,1024], index: 3, kind: output, shape index: {}]
  %s4 = sld [smem:[#allocation0]]
  $region45: #{decoder_block_forward.9} parent=0
    _
  %s6 = ssub.s32 1, %s4
  %s7 = scalar_select 0, %s6, %s4
  loop: start=0, step=1, limit=4
  $region2: #{decoder_block_forward.9} parent=0 // loop_pre_header
    _
  $region3: #{decoder_block_forward.9} parent=0 // loop_header
    %s9 = sphi 0, %s13
    %p10 = scmp.ge.s32.totalorder %s9, 4
    %s19 = sphi 0, %s21
    %s22 = sphi 0, %s19
    %s23 = sphi 0, %s22
    %s39 = sphi 0, %s23
    %s43 = sphi 0, %s43
    %s45 = sphi 0, %s43
    %s46 = sphi 0, %s45
    %s60 = sphi 0, %s46
    %s64 = sphi 0, %s64
    %s66 = sphi 0, %s64
    %s67 = sphi 0, %s66
    %s81 = sphi 0, %s67
    %s87 = sphi 0, %s89
    %s90 = sphi 0, %s87
    %s91 = sphi 0, %s90
    %s107 = sphi 0, %s91
  $region4: #{decoder_block_forward.9} parent=0 // loop_header_branch
    %12 = sbr.rel (%p10) target = $region8
  $region5: #{decoder_block_forward.9} parent=0 // loop_body
    %s14 = ssub.s32 %s9, 1
    %s15 = ssub.s32 %s9, 2
    %s16 = sadd.s32 %s9, 1
    %s17 = ssub.s32 %s9, %s16
    %p18 = scmp.eq.s32.totalorder %s17, 0
    %s20 = sadd.s32 %s19, 1
    %s21 = scalar_select %p18, %s19, %s20
    %p24 = pneg %p18
    %p25 = scmp.eq.s32.totalorder %s9, 1
    %p26 = por %p24, %p25
    %p27 = scmp.ne.s32.totalorder %s19, %s22
    %p28 = scmp.eq.s32.totalorder %s9, 0
    %p29 = por %p27, %p28
    %p30 = scmp.ne.s32.totalorder %s19, %s22
    %p31 = scmp.eq.s32.totalorder %s14, 1
    %p32 = por %p30, %p31
    %p33 = scmp.ne.s32.totalorder %s22, %s23
    %p34 = scmp.eq.s32.totalorder %s14, 0
    %p35 = por %p33, %p34
    %p36 = scmp.ne.s32.totalorder %s22, %s23
    %p37 = scmp.eq.s32.totalorder %s15, 1
    %p38 = por %p36, %p37
    %p40 = scmp.ne.s32.totalorder %s23, %s39
    %p41 = scmp.eq.s32.totalorder %s15, 0
    %p42 = por %p40, %p41
    %s44 = sadd.s32 %s43, 1
    %p47 = scmp.eq.s32.totalorder %s9, 1
    %p48 = scmp.ne.s32.totalorder %s43, %s45
    %p49 = scmp.eq.s32.totalorder %s9, 0
    %p50 = por %p48, %p49
    %p51 = scmp.ne.s32.totalorder %s43, %s45
    %p52 = scmp.eq.s32.totalorder %s14, 1
    %p53 = por %p51, %p52
    %p54 = scmp.ne.s32.totalorder %s45, %s46
    %p55 = scmp.eq.s32.totalorder %s14, 0
    %p56 = por %p54, %p55
    %p57 = scmp.ne.s32.totalorder %s45, %s46
    %p58 = scmp.eq.s32.totalorder %s15, 1
    %p59 = por %p57, %p58
    %p61 = scmp.ne.s32.totalorder %s46, %s60
    %p62 = scmp.eq.s32.totalorder %s15, 0
    %p63 = por %p61, %p62
    %s65 = sadd.s32 %s64, 1
    %p68 = scmp.eq.s32.totalorder %s9, 1
    %p69 = scmp.ne.s32.totalorder %s64, %s66
    %p70 = scmp.eq.s32.totalorder %s9, 0
    %p71 = por %p69, %p70
    %p72 = scmp.ne.s32.totalorder %s64, %s66
    %p73 = scmp.eq.s32.totalorder %s14, 1
    %p74 = por %p72, %p73
    %p75 = scmp.ne.s32.totalorder %s66, %s67
    %p76 = scmp.eq.s32.totalorder %s14, 0
    %p77 = por %p75, %p76
    %p78 = scmp.ne.s32.totalorder %s66, %s67
    %p79 = scmp.eq.s32.totalorder %s15, 1
    %p80 = por %p78, %p79
    %p82 = scmp.ne.s32.totalorder %s67, %s81
    %p83 = scmp.eq.s32.totalorder %s15, 0
    %p84 = por %p82, %p83
    %s85 = ssub.s32 %s9, %s16
    %p86 = scmp.eq.s32.totalorder %s85, 0
    %s88 = sadd.s32 %s87, 1
    %s89 = scalar_select %p86, %s87, %s88
    %p92 = pneg %p86
    %p93 = scmp.eq.s32.totalorder %s9, 1
    %p94 = por %p92, %p93
    %p95 = scmp.ne.s32.totalorder %s87, %s90
    %p96 = scmp.eq.s32.totalorder %s9, 0
    %p97 = por %p95, %p96
    %p98 = scmp.ne.s32.totalorder %s87, %s90
    %p99 = scmp.eq.s32.totalorder %s14, 1
    %p100 = por %p98, %p99
    %p101 = scmp.ne.s32.totalorder %s90, %s91
    %p102 = scmp.eq.s32.totalorder %s14, 0
    %p103 = por %p101, %p102
    %p104 = scmp.ne.s32.totalorder %s90, %s91
    %p105 = scmp.eq.s32.totalorder %s15, 1
    %p106 = por %p104, %p105
    %p108 = scmp.ne.s32.totalorder %s91, %s107
    %p109 = scmp.eq.s32.totalorder %s15, 0
    %p110 = por %p108, %p109
    %p111 = scmp.le.s32.totalorder 1, %s9
    %p112 = scmp.lt.s32.totalorder %s9, 3
    %p113 = pnand %p111, %p112
    %p114 = pneg %p113
    // Predicated region
    $region9: #{decoder_block_forward.9} parent=5 // pred_check
      _
    $region10: #{decoder_block_forward.9} parent=5 // pred_check_branch
      %116 = sbr.rel (%p113) target = $region12
    $region11: #{decoder_block_forward.9} parent=5 // pred_region
      %s117 = ssub.s32 %s9, 1
      // Predicated region
      $region13: #{decoder_block_forward.9} parent=11 // pred_check
        %p118 = pneg %p56
      $region14: #{decoder_block_forward.9} parent=11 // pred_check_branch
        %120 = sbr.rel (%p118) target = $region16
      $region15: #{decoder_block_forward.9} parent=11 // pred_region
        _
      $region16: #{decoder_block_forward.9} parent=11 // pred_fallthru
        _
      // Predicated region
      $region17: #{decoder_block_forward.9} parent=11 // pred_check
        %p121 = pneg %p77
      $region18: #{decoder_block_forward.9} parent=11 // pred_check_branch
        %123 = sbr.rel (%p121) target = $region20
      $region19: #{decoder_block_forward.9} parent=11 // pred_region
        _
      $region20: #{decoder_block_forward.9} parent=11 // pred_fallthru
        _
    $region12: #{decoder_block_forward.9} parent=5 // pred_fallthru
      _
    %p124 = scmp.lt.s32.totalorder %s9, 2
    // Predicated region
    $region21: #{decoder_block_forward.9} parent=5 // pred_check
      %p125 = pneg %p124
    $region22: #{decoder_block_forward.9} parent=5 // pred_check_branch
      %127 = sbr.rel (%p125) target = $region24
    $region23: #{decoder_block_forward.9} parent=5 // pred_region
      // Predicated region
      $region25: #{decoder_block_forward.9} parent=23 // pred_check
        %p128 = pneg %p29
      $region26: #{decoder_block_forward.9} parent=23 // pred_check_branch
        %130 = sbr.rel (%p128) target = $region28
      $region27: #{decoder_block_forward.9} parent=23 // pred_region
        %s131 = smul.u32 4, %s9
        %p132 = scmp.lt.s32.totalorder %s131, 7
        %s133 = scalar_select %p132, %s131, 7
        %s134 = smul.addr %s133, 8
        %s135 = scalar_lea.vmem %s0, %s134
        %s136 = smul.u32 4, %s9
      $region28: #{decoder_block_forward.9} parent=23 // pred_fallthru
        _
    $region24: #{decoder_block_forward.9} parent=5 // pred_fallthru
      _
    %p137 = scmp.le.s32.totalorder 1, %s9
    %p138 = scmp.lt.s32.totalorder %s9, 3
    %p139 = pnand %p137, %p138
    %p140 = pneg %p139
    // Predicated region
    $region29: #{decoder_block_forward.9} parent=5 // pred_check
      _
    $region30: #{decoder_block_forward.9} parent=5 // pred_check_branch
      %142 = sbr.rel (%p139) target = $region32
    $region31: #{decoder_block_forward.9} parent=5 // pred_region
      %s143 = ssub.s32 %s9, 1
      %s144 = smul.u32 4, %s14
      %p145 = scmp.lt.s32.totalorder %s144, 7
      %s146 = scalar_select %p145, %s144, 7
      %s147 = smul.addr %s146, 8
      %s148 = scalar_lea.vmem %s0, %s147
      %p149 = pneg %p35
      %p150 = pneg %p32
      %p151 = pneg %p56
      %p152 = pneg %p53
      %p153 = pneg %p77
      %p154 = pneg %p74
      %p155 = pneg %p103
      %p156 = pneg %p100
      %s157 = smul.u32 4, %s14
      %p158 = scmp.lt.s32.totalorder %s157, 7
      %s159 = scalar_select %p158, %s157, 7
      %s160 = smul.addr %s159, 8
      %s161 = scalar_lea.vmem %s3, %s160
      %s162 = smul.u32 4, %s14
      %p163 = scmp.lt.s32.totalorder %s162, 7
      %s164 = scalar_select %p163, %s162, 7
      %s165 = smul.addr %s164, 8
      %s166 = scalar_lea.vmem %s0, %s165
      %s167 = smul.u32 4, %s14
      %s168 = smul.u32 4, %s14
      %p169 = scmp.lt.s32.totalorder %s168, 7
      %s170 = scalar_select %p169, %s168, 7
      %s171 = smul.addr %s170, 8
      %s172 = scalar_lea.vmem %s3, %s171
      %s173 = smul.u32 4, %s14
      %v174 = vld [vmem:[%s166] sm:$0xff]
      %v175 = vld [vmem:[%s166 + $0x8] sm:$0xff]
      %v176 = vld [vmem:[%s166 + $0x10] sm:$0xff]
      %v177 = vld [vmem:[%s166 + $0x18] sm:$0xff]
      %v178 = vld [vmem:[%s1] sm:$0xff]
      %180 = vset.pattern.permute.xlu0 0
      %181 = vperm.xlu0 %180, %v178
      %v182 = vpop.permute.xlu0 %181
      %v184 = vmul.f32 %v174, %v182
      %v185 = vmul.f32 %v175, %v182
      %v186 = vmul.f32 %v176, %v182
      %v187 = vmul.f32 %v177, %v182
      %v188 = vld [vmem:[%s2] sm:$0xff]
      %190 = vset.pattern.permute.xlu0 0
      %191 = vperm.xlu0 %190, %v188
      %v192 = vpop.permute.xlu0 %191
      %v194 = vadd.f32 %v184, %v192
      %v195 = vadd.f32 %v185, %v192
      %v196 = vadd.f32 %v186, %v192
      %v197 = vadd.f32 %v187, %v192
      %v198 = vmax.f32 %v194, 0.0
      %v199 = vmax.f32 %v195, 0.0
      %v200 = vmax.f32 %v196, 0.0
      %v201 = vmax.f32 %v197, 0.0
      %202 = vst [vmem:[%s172] sm:$0xff] %v198
      %203 = vst [vmem:[%s172 + $0x8] sm:$0xff] %v199
      %204 = vst [vmem:[%s172 + $0x10] sm:$0xff] %v200
      %205 = vst [vmem:[%s172 + $0x18] sm:$0xff] %v201
      %s206 = smul.u32 4, %s14
      %p207 = scmp.lt.s32.totalorder %s206, 7
      %s208 = scalar_select %p207, %s206, 7
      %s209 = smul.addr %s208, 8
      %s210 = scalar_lea.vmem %s3, %s209
      // Predicated region
      $region33: #{decoder_block_forward.9} parent=31 // pred_check
        %p211 = pneg %p100
      $region34: #{decoder_block_forward.9} parent=31 // pred_check_branch
        %213 = sbr.rel (%p211) target = $region36
      $region35: #{decoder_block_forward.9} parent=31 // pred_region
        %s214 = smul.u32 4, %s14
      $region36: #{decoder_block_forward.9} parent=31 // pred_fallthru
        _
    $region32: #{decoder_block_forward.9} parent=5 // pred_fallthru
      _
    %p215 = scmp.le.s32.totalorder 2, %s9
    // Predicated region
    $region37: #{decoder_block_forward.9} parent=5 // pred_check
      %p216 = pneg %p215
    $region38: #{decoder_block_forward.9} parent=5 // pred_check_branch
      %218 = sbr.rel (%p216) target = $region40
    $region39: #{decoder_block_forward.9} parent=5 // pred_region
      %s219 = ssub.s32 %s9, 2
      // Predicated region
      $region41: #{decoder_block_forward.9} parent=39 // pred_check
        %p220 = pneg %p106
      $region42: #{decoder_block_forward.9} parent=39 // pred_check_branch
        %222 = sbr.rel (%p220) target = $region44
      $region43: #{decoder_block_forward.9} parent=39 // pred_region
        %s223 = smul.u32 4, %s15
        %p224 = scmp.lt.s32.totalorder %s223, 7
        %s225 = scalar_select %p224, %s223, 7
        %s226 = smul.addr %s225, 8
        %s227 = scalar_lea.vmem %s3, %s226
      $region44: #{decoder_block_forward.9} parent=39 // pred_fallthru
        _
    $region40: #{decoder_block_forward.9} parent=5 // pred_fallthru
      _
  $region6: #{decoder_block_forward.9} parent=0 // loop_footer
    %s13 = sadd.s32 1, %s9
  $region7: #{decoder_block_forward.9} parent=0 // loop_footer_branch
    %8 = sbr.rel target = $region3
  $region8: #{decoder_block_forward.9} parent=0 // loop_exit
    _

</llo_original>
